<compile_context>
chip_gen: v7x
topology: tpu7x:2x2x1
jax: 0.10.0
libtpu: 0.0.40
codegen_flags: <defaults>
</compile_context>

<pallas_src>
import functools
import math

import jax
import jax.numpy as jnp
from jax.experimental import pallas as pl
from jax.experimental.pallas import tpu as pltpu

EPS = 1e-12                       # config.layer_norm_eps
_MXU_DTYPE = jnp.bfloat16         # MXU operand dtype (f32 accumulation)


# ---------------------------------------------------------------------------
# In-kernel helpers
# ---------------------------------------------------------------------------

def _mxu(a, b):
    """MXU matmul: bf16 operands, f32 accumulation."""
    return jnp.dot(a.astype(_MXU_DTYPE), b.astype(_MXU_DTYPE),
                   preferred_element_type=jnp.float32)


def _layernorm(x, g, b, eps):
    """BertLayerNorm over the last dim (biased variance), f32 statistics."""
    u = jnp.mean(x, axis=-1, keepdims=True)
    s = jnp.mean(jnp.square(x - u), axis=-1, keepdims=True)
    return (x - u) * jax.lax.rsqrt(s + eps) * g + b


def _gelu(x):
    """pytorch_pretrained_bert gelu: x * 0.5 * (1 + erf(x / sqrt(2)))."""
    return 0.5 * x * (1.0 + jax.lax.erf(x * (1.0 / math.sqrt(2.0))))


# ---------------------------------------------------------------------------
# Fused encoder kernel: one grid step = (batch b, layer l)
# ---------------------------------------------------------------------------

def _encoder_kernel(x_ref, avail_ref, encg_ref, encb_ref,
                    wqkv_ref, bqkv_ref, wo_ref, bo_ref,
                    ln1g_ref, ln1b_ref,
                    wi_ref, bi_ref, wo2_ref, bo2_ref,
                    ln2g_ref, ln2b_ref,
                    probs_ref, hidden_ref,
                    h_sc,
                    *, num_heads, head_dim, hidden, scale, eps):
    l = pl.program_id(1)

    # Top-level LayerNorm (+ dropout == identity) on the first layer step only;
    # the result seeds the VMEM-resident hidden state for this batch element.
    @pl.when(l == 0)
    def _():
        x = x_ref[0].astype(jnp.float32)                          # (S, H)
        h_sc[...] = _layernorm(x, encg_ref[...], encb_ref[...], eps)

    h = h_sc[...]                                                 # (S, H) f32
    mask = avail_ref[0, 0]                                        # (1, S) additive

    # ---- BertSelfAttention: fused QKV projection ----
    qkv = _mxu(h, wqkv_ref[0]) + bqkv_ref[0]                      # (S, 3H)

    # Per-head attention via static head loop with dh-wide lane slices
    # (no wrapper-side split_heads transpose / HBM materialization).
    ctx_parts = []
    for hh in range(num_heads):
        lo = hh * head_dim
        q = qkv[:, lo:lo + head_dim]                              # (S, dh)
        k = qkv[:, hidden + lo:hidden + lo + head_dim]            # (S, dh)
        v = qkv[:, 2 * hidden + lo:2 * hidden + lo + head_dim]    # (S, dh)

        scores = _mxu(q, k.T) * scale + mask                      # (S, S)
        mx = jnp.max(scores, axis=-1, keepdims=True)
        e = jnp.exp(scores - mx)
        denom = jnp.sum(e, axis=-1, keepdims=True)
        p = e * pl.reciprocal(denom, approx=True)                 # softmax (EUP recip)
        # attention-probs dropout: identity in eval mode.
        probs_ref[0, 0, hh] = p.astype(probs_ref.dtype)
        ctx_parts.append(_mxu(p, v))                              # (S, dh)
    ctx = jnp.concatenate(ctx_parts, axis=-1)                     # (S, H)

    # ---- BertSelfOutput: dense -> dropout(id) -> LayerNorm(out + input) ----
    attn_out = _mxu(ctx, wo_ref[0]) + bo_ref[0]
    h1 = _layernorm(attn_out + h, ln1g_ref[0], ln1b_ref[0], eps)

    # ---- BertIntermediate (gelu) + BertOutput ----
    inter = _gelu(_mxu(h1, wi_ref[0]) + bi_ref[0])
    ffn = _mxu(inter, wo2_ref[0]) + bo2_ref[0]
    h2 = _layernorm(ffn + h1, ln2g_ref[0], ln2b_ref[0], eps)

    # Carry hidden state to the next layer step; emit per-layer hidden output.
    h_sc[...] = h2
    hidden_ref[0, 0] = h2.astype(hidden_ref.dtype)


# ---------------------------------------------------------------------------
# Wrapper
# ---------------------------------------------------------------------------

def encoder_forward(x, avail, params, *, num_heads):
    """simple_bert_encoder.forward: x -> LayerNorm -> dropout(id) -> N BertLayers.

    Returns ([hidden_l for each layer], [attention_probs_l for each layer]).
    """
    B, S, H = x.shape
    L = params["wqkv"].shape[0]
    I = params["wi"].shape[-1]
    NH = num_heads
    dh = H // NH
    scale = 1.0 / math.sqrt(dh)

    kernel = functools.partial(
        _encoder_kernel,
        num_heads=NH, head_dim=dh, hidden=H, scale=scale, eps=EPS)

    probs, hidden = pl.pallas_call(
        kernel,
        out_shape=(
            jax.ShapeDtypeStruct((L, B, NH, S, S), jnp.float32),   # attention probs
            jax.ShapeDtypeStruct((L, B, S, H), x.dtype),           # hidden states
        ),
        grid_spec=pltpu.PrefetchScalarGridSpec(
            num_scalar_prefetch=0,
            grid=(B, L),                                           # (parallel, sequential)
            in_specs=[
                pl.BlockSpec((1, S, H),      lambda b, l: (b, 0, 0)),     # x
                pl.BlockSpec((1, 1, 1, S),   lambda b, l: (b, 0, 0, 0)),  # avail mask
                pl.BlockSpec((1, H),         lambda b, l: (0, 0)),        # encoder LN gamma
                pl.BlockSpec((1, H),         lambda b, l: (0, 0)),        # encoder LN beta
                pl.BlockSpec((1, H, 3 * H),  lambda b, l: (l, 0, 0)),     # wqkv (fused)
                pl.BlockSpec((1, 1, 3 * H),  lambda b, l: (l, 0, 0)),     # bqkv
                pl.BlockSpec((1, H, H),      lambda b, l: (l, 0, 0)),     # attn out W
                pl.BlockSpec((1, 1, H),      lambda b, l: (l, 0, 0)),     # attn out b
                pl.BlockSpec((1, 1, H),      lambda b, l: (l, 0, 0)),     # ln1 gamma
                pl.BlockSpec((1, 1, H),      lambda b, l: (l, 0, 0)),     # ln1 beta
                pl.BlockSpec((1, H, I),      lambda b, l: (l, 0, 0)),     # intermediate W
                pl.BlockSpec((1, 1, I),      lambda b, l: (l, 0, 0)),     # intermediate b
                pl.BlockSpec((1, I, H),      lambda b, l: (l, 0, 0)),     # output W
                pl.BlockSpec((1, 1, H),      lambda b, l: (l, 0, 0)),     # output b
                pl.BlockSpec((1, 1, H),      lambda b, l: (l, 0, 0)),     # ln2 gamma
                pl.BlockSpec((1, 1, H),      lambda b, l: (l, 0, 0)),     # ln2 beta
            ],
            out_specs=(
                pl.BlockSpec((1, 1, NH, S, S), lambda b, l: (l, b, 0, 0, 0)),
                pl.BlockSpec((1, 1, S, H),     lambda b, l: (l, b, 0, 0)),
            ),
            scratch_shapes=[pltpu.VMEM((S, H), jnp.float32)],      # resident hidden state
        ),
        compiler_params=pltpu.CompilerParams(
            dimension_semantics=("parallel", "arbitrary")),
    )(x, avail,
      params["ln_g"], params["ln_b"],
      params["wqkv"], params["bqkv"], params["wo"], params["bo"],
      params["ln1_g"], params["ln1_b"],
      params["wi"], params["bi"], params["wo2"], params["bo2"],
      params["ln2_g"], params["ln2_b"])

    hidden_list = [hidden[l] for l in range(L)]
    att_list = [probs[l] for l in range(L)]
    return hidden_list, att_list


# ---------------------------------------------------------------------------
# Parameters (deterministic synthetic init; all layers identical, matching
# nn.ModuleList([copy.deepcopy(layer) ...]) at init time).
# ---------------------------------------------------------------------------

def init_params(key, num_layers, hidden, intermediate):
    def nrm(k, shape):
        return 0.02 * jax.random.normal(k, shape, jnp.float32)

    def per_layer(a):
        return jnp.repeat(a[None], num_layers, axis=0)

    keys = jax.random.split(key, 6)
    wq = nrm(keys[0], (hidden, hidden))
    wk = nrm(keys[1], (hidden, hidden))
    wv = nrm(keys[2], (hidden, hidden))
    wqkv = jnp.concatenate([wq, wk, wv], axis=1)              # (H, 3H) fused QKV

    layer = {
        "wqkv": wqkv,                         "bqkv": jnp.zeros((1, 3 * hidden), jnp.float32),
        "wo":   nrm(keys[3], (hidden, hidden)), "bo": jnp.zeros((1, hidden), jnp.float32),
        "ln1_g": jnp.ones((1, hidden), jnp.float32), "ln1_b": jnp.zeros((1, hidden), jnp.float32),
        "wi":   nrm(keys[4], (hidden, intermediate)), "bi": jnp.zeros((1, intermediate), jnp.float32),
        "wo2":  nrm(keys[5], (intermediate, hidden)), "bo2": jnp.zeros((1, hidden), jnp.float32),
        "ln2_g": jnp.ones((1, hidden), jnp.float32), "ln2_b": jnp.zeros((1, hidden), jnp.float32),
    }
    params = {k: per_layer(v) for k, v in layer.items()}      # stacked (L, ...) per layer
    params["ln_g"] = jnp.ones((1, hidden), jnp.float32)       # top-level BertLayerNorm
    params["ln_b"] = jnp.zeros((1, hidden), jnp.float32)
    return params


# ---------------------------------------------------------------------------
# Main
# ---------------------------------------------------------------------------

if __name__ == "__main__":
    B, S, H = 2, 8, 32
    NUM_HEADS, NUM_LAYERS, INTERMEDIATE = 4, 2, 64

    key = jax.random.PRNGKey(0)
    kx, kp = jax.random.split(key)

    x = jax.random.normal(kx, (B, S, H), jnp.float32)
    # `avail`: additive attention mask, broadcast to (B, NH, S, S). 0.0 = available.
    avail = jnp.zeros((B, 1, 1, S), jnp.float32)

    params = init_params(kp, NUM_LAYERS, H, INTERMEDIATE)

    fwd = jax.jit(functools.partial(encoder_forward, num_heads=NUM_HEADS))
    hidden_list, att_list = fwd(x, avail, params)
    jax.block_until_ready((hidden_list, att_list))

    assert len(hidden_list) == NUM_LAYERS and len(att_list) == NUM_LAYERS
    assert hidden_list[-1].shape == (B, S, H)
    assert att_list[-1].shape == (B, NUM_HEADS, S, S)
    assert all(bool(jnp.all(jnp.isfinite(h))) for h in hidden_list)
    print("KERNEL_OK")
</pallas_src>

<mosaic_0001>
module attributes {stable_mosaic.version = 11 : i64} {
  func.func @_encoder_kernel(%arg0: i32, %arg1: i32, %arg2: memref<1x8x32xf32, #tpu.memory_space<vmem>>, %arg3: memref<1x1x1x8xf32, #tpu.memory_space<vmem>>, %arg4: memref<1x32xf32, #tpu.memory_space<vmem>>, %arg5: memref<1x32xf32, #tpu.memory_space<vmem>>, %arg6: memref<1x32x96xf32, #tpu.memory_space<vmem>>, %arg7: memref<1x1x96xf32, #tpu.memory_space<vmem>>, %arg8: memref<1x32x32xf32, #tpu.memory_space<vmem>>, %arg9: memref<1x1x32xf32, #tpu.memory_space<vmem>>, %arg10: memref<1x1x32xf32, #tpu.memory_space<vmem>>, %arg11: memref<1x1x32xf32, #tpu.memory_space<vmem>>, %arg12: memref<1x32x64xf32, #tpu.memory_space<vmem>>, %arg13: memref<1x1x64xf32, #tpu.memory_space<vmem>>, %arg14: memref<1x64x32xf32, #tpu.memory_space<vmem>>, %arg15: memref<1x1x32xf32, #tpu.memory_space<vmem>>, %arg16: memref<1x1x32xf32, #tpu.memory_space<vmem>>, %arg17: memref<1x1x32xf32, #tpu.memory_space<vmem>>, %arg18: memref<1x1x4x8x8xf32, #tpu.memory_space<vmem>>, %arg19: memref<1x1x8x32xf32, #tpu.memory_space<vmem>>, %arg20: memref<8x32xf32, #tpu.memory_space<vmem>>) attributes {dimension_semantics = [#tpu.dimension_semantics<parallel>, #tpu.dimension_semantics<arbitrary>], iteration_bounds = array<i64: 2, 2>, scalar_prefetch = 0 : i64, scratch_operands = 1 : i64, tpu.core_type = #tpu.core_type<tc>, window_params = [{transform_indices = @transform_0, window_bounds = array<i64: 1, 8, 32>}, {transform_indices = @transform_1, window_bounds = array<i64: 1, 1, 1, 8>}, {pipeline_mode = #tpu.pipeline_mode<synchronous>, transform_indices = @transform_2, window_bounds = array<i64: 1, 32>}, {pipeline_mode = #tpu.pipeline_mode<synchronous>, transform_indices = @transform_3, window_bounds = array<i64: 1, 32>}, {transform_indices = @transform_4, window_bounds = array<i64: 1, 32, 96>}, {transform_indices = @transform_5, window_bounds = array<i64: 1, 1, 96>}, {transform_indices = @transform_6, window_bounds = array<i64: 1, 32, 32>}, {transform_indices = @transform_7, window_bounds = array<i64: 1, 1, 32>}, {transform_indices = @transform_8, window_bounds = array<i64: 1, 1, 32>}, {transform_indices = @transform_9, window_bounds = array<i64: 1, 1, 32>}, {transform_indices = @transform_10, window_bounds = array<i64: 1, 32, 64>}, {transform_indices = @transform_11, window_bounds = array<i64: 1, 1, 64>}, {transform_indices = @transform_12, window_bounds = array<i64: 1, 64, 32>}, {transform_indices = @transform_13, window_bounds = array<i64: 1, 1, 32>}, {transform_indices = @transform_14, window_bounds = array<i64: 1, 1, 32>}, {transform_indices = @transform_15, window_bounds = array<i64: 1, 1, 32>}, {transform_indices = @transform_16, window_bounds = array<i64: 1, 1, 4, 8, 8>}, {transform_indices = @transform_17, window_bounds = array<i64: 1, 1, 8, 32>}]} {
    %c0_i32 = arith.constant 0 : i32
    %0 = arith.cmpi eq, %arg1, %c0_i32 : i32
    %1 = arith.extui %0 : i1 to i32
    %c0_i32_0 = arith.constant 0 : i32
    %2 = arith.cmpi ne, %1, %c0_i32_0 : i32
    scf.if %2 {
      %c0_101 = arith.constant 0 : index
      %c0_102 = arith.constant 0 : index
      %c0_103 = arith.constant 0 : index
      %217 = vector.load %arg2[%c0_101, %c0_102, %c0_103] : memref<1x8x32xf32, #tpu.memory_space<vmem>>, vector<1x8x32xf32>
      %218 = vector.shape_cast %217 : vector<1x8x32xf32> to vector<8x32xf32>
      %c0_104 = arith.constant 0 : index
      %c0_105 = arith.constant 0 : index
      %219 = vector.load %arg4[%c0_104, %c0_105] : memref<1x32xf32, #tpu.memory_space<vmem>>, vector<1x32xf32>
      %c0_106 = arith.constant 0 : index
      %c0_107 = arith.constant 0 : index
      %220 = vector.load %arg5[%c0_106, %c0_107] : memref<1x32xf32, #tpu.memory_space<vmem>>, vector<1x32xf32>
      %cst_108 = arith.constant dense<0.000000e+00> : vector<8xf32>
      %221 = vector.multi_reduction <add>, %218, %cst_108 [1] : vector<8x32xf32> to vector<8xf32>
      %222 = vector.shape_cast %221 : vector<8xf32> to vector<8x1xf32>
      %cst_109 = arith.constant 3.200000e+01 : f32
      %223 = vector.broadcast %cst_109 : f32 to vector<8x1xf32>
      %224 = arith.divf %222, %223 : vector<8x1xf32>
      %225 = vector.broadcast %224 : vector<8x1xf32> to vector<8x32xf32>
      %226 = arith.subf %218, %225 : vector<8x32xf32>
      %227 = arith.mulf %226, %226 : vector<8x32xf32>
      %cst_110 = arith.constant dense<0.000000e+00> : vector<8xf32>
      %228 = vector.multi_reduction <add>, %227, %cst_110 [1] : vector<8x32xf32> to vector<8xf32>
      %229 = vector.shape_cast %228 : vector<8xf32> to vector<8x1xf32>
      %cst_111 = arith.constant 3.200000e+01 : f32
      %230 = vector.broadcast %cst_111 : f32 to vector<8x1xf32>
      %231 = arith.divf %229, %230 : vector<8x1xf32>
      %232 = vector.broadcast %224 : vector<8x1xf32> to vector<8x32xf32>
      %233 = arith.subf %218, %232 : vector<8x32xf32>
      %cst_112 = arith.constant 9.99999996E-13 : f32
      %234 = vector.broadcast %cst_112 : f32 to vector<8x1xf32>
      %235 = arith.addf %231, %234 : vector<8x1xf32>
      %236 = math.rsqrt %235 : vector<8x1xf32>
      %237 = vector.broadcast %236 : vector<8x1xf32> to vector<8x32xf32>
      %238 = arith.mulf %233, %237 : vector<8x32xf32>
      %239 = vector.broadcast %219 : vector<1x32xf32> to vector<8x32xf32>
      %240 = arith.mulf %238, %239 : vector<8x32xf32>
      %241 = vector.broadcast %220 : vector<1x32xf32> to vector<8x32xf32>
      %242 = arith.addf %240, %241 : vector<8x32xf32>
      %c0_113 = arith.constant 0 : index
      %c0_114 = arith.constant 0 : index
      %243 = vector.load %arg20[%c0_113, %c0_114] : memref<8x32xf32, #tpu.memory_space<vmem>>, vector<8x32xf32>
      tpu.vector_store %arg20[%c0_113, %c0_114], %242 {strides = array<i32>} : memref<8x32xf32, #tpu.memory_space<vmem>>, vector<8x32xf32>,
    } else {
    }
    %c0 = arith.constant 0 : index
    %c0_1 = arith.constant 0 : index
    %3 = vector.load %arg20[%c0, %c0_1] : memref<8x32xf32, #tpu.memory_space<vmem>>, vector<8x32xf32>
    %c0_2 = arith.constant 0 : index
    %c0_3 = arith.constant 0 : index
    %c0_4 = arith.constant 0 : index
    %c0_5 = arith.constant 0 : index
    %4 = vector.load %arg3[%c0_2, %c0_3, %c0_4, %c0_5] : memref<1x1x1x8xf32, #tpu.memory_space<vmem>>, vector<1x1x1x8xf32>
    %5 = vector.shape_cast %4 : vector<1x1x1x8xf32> to vector<1x8xf32>
    %c0_6 = arith.constant 0 : index
    %c0_7 = arith.constant 0 : index
    %c0_8 = arith.constant 0 : index
    %6 = vector.load %arg6[%c0_6, %c0_7, %c0_8] : memref<1x32x96xf32, #tpu.memory_space<vmem>>, vector<1x32x96xf32>
    %7 = vector.shape_cast %6 : vector<1x32x96xf32> to vector<32x96xf32>
    %8 = arith.truncf %3 : vector<8x32xf32> to vector<8x32xbf16>
    %9 = arith.truncf %7 : vector<32x96xf32> to vector<32x96xbf16>
    %cst = arith.constant dense<0.000000e+00> : vector<8x96xf32>
    %10 = tpu.matmul %8, %9, %cst {dimension_numbers = #tpu.dot_dimension_numbers<[1], [0], [0], [1], [0, 0, 1, 1], [], []>} : vector<8x32xbf16>, vector<32x96xbf16>, vector<8x96xf32> -> vector<8x96xf32>
    %c0_9 = arith.constant 0 : index
    %c0_10 = arith.constant 0 : index
    %c0_11 = arith.constant 0 : index
    %11 = vector.load %arg7[%c0_9, %c0_10, %c0_11] : memref<1x1x96xf32, #tpu.memory_space<vmem>>, vector<1x1x96xf32>
    %12 = vector.shape_cast %11 : vector<1x1x96xf32> to vector<1x96xf32>
    %13 = vector.broadcast %12 : vector<1x96xf32> to vector<8x96xf32>
    %14 = arith.addf %10, %13 : vector<8x96xf32>
    %15 = vector.extract_strided_slice %14 {offsets = [0, 0], sizes = [8, 8], strides = [1, 1]} : vector<8x96xf32> to vector<8x8xf32>
    %16 = vector.extract_strided_slice %14 {offsets = [0, 32], sizes = [8, 8], strides = [1, 1]} : vector<8x96xf32> to vector<8x8xf32>
    %17 = vector.extract_strided_slice %14 {offsets = [0, 64], sizes = [8, 8], strides = [1, 1]} : vector<8x96xf32> to vector<8x8xf32>
    %18 = tpu.transpose %16, [1, 0] : vector<8x8xf32> -> vector<8x8xf32>
    %19 = arith.truncf %15 : vector<8x8xf32> to vector<8x8xbf16>
    %20 = arith.truncf %18 : vector<8x8xf32> to vector<8x8xbf16>
    %cst_12 = arith.constant dense<0.000000e+00> : vector<8x8xf32>
    %21 = tpu.matmul %19, %20, %cst_12 {dimension_numbers = #tpu.dot_dimension_numbers<[1], [0], [0], [1], [0, 0, 1, 1], [], []>} : vector<8x8xbf16>, vector<8x8xbf16>, vector<8x8xf32> -> vector<8x8xf32>
    %cst_13 = arith.constant 0.353553385 : f32
    %22 = vector.broadcast %cst_13 : f32 to vector<8x8xf32>
    %23 = arith.mulf %21, %22 : vector<8x8xf32>
    %24 = vector.broadcast %5 : vector<1x8xf32> to vector<8x8xf32>
    %25 = arith.addf %23, %24 : vector<8x8xf32>
    %cst_14 = arith.constant dense<0xFF800000> : vector<8xf32>
    %26 = vector.multi_reduction <maximumf>, %25, %cst_14 [1] : vector<8x8xf32> to vector<8xf32>
    %27 = vector.shape_cast %26 : vector<8xf32> to vector<8x1xf32>
    %28 = vector.broadcast %27 : vector<8x1xf32> to vector<8x8xf32>
    %29 = arith.subf %25, %28 : vector<8x8xf32>
    %30 = math.exp %29 : vector<8x8xf32>
    %cst_15 = arith.constant dense<0.000000e+00> : vector<8xf32>
    %31 = vector.multi_reduction <add>, %30, %cst_15 [1] : vector<8x8xf32> to vector<8xf32>
    %32 = vector.shape_cast %31 : vector<8xf32> to vector<8x1xf32>
    %33 = tpu.reciprocal %32 {approx = true} : vector<8x1xf32> -> vector<8x1xf32>
    %34 = vector.broadcast %33 : vector<8x1xf32> to vector<8x8xf32>
    %35 = arith.mulf %30, %34 : vector<8x8xf32>
    %c0_16 = arith.constant 0 : index
    %c0_17 = arith.constant 0 : index
    %c0_18 = arith.constant 0 : index
    %c0_19 = arith.constant 0 : index
    %c0_20 = arith.constant 0 : index
    %36 = vector.load %arg18[%c0_16, %c0_17, %c0_18, %c0_19, %c0_20] : memref<1x1x4x8x8xf32, #tpu.memory_space<vmem>>, vector<1x1x1x8x8xf32>
    %37 = vector.shape_cast %36 : vector<1x1x1x8x8xf32> to vector<8x8xf32>
    %38 = vector.shape_cast %35 : vector<8x8xf32> to vector<1x1x1x8x8xf32>
    tpu.vector_store %arg18[%c0_16, %c0_17, %c0_18, %c0_19, %c0_20], %38 {strides = array<i32>} : memref<1x1x4x8x8xf32, #tpu.memory_space<vmem>>, vector<1x1x1x8x8xf32>,
    %39 = arith.truncf %35 : vector<8x8xf32> to vector<8x8xbf16>
    %40 = arith.truncf %17 : vector<8x8xf32> to vector<8x8xbf16>
    %cst_21 = arith.constant dense<0.000000e+00> : vector<8x8xf32>
    %41 = tpu.matmul %39, %40, %cst_21 {dimension_numbers = #tpu.dot_dimension_numbers<[1], [0], [0], [1], [0, 0, 1, 1], [], []>} : vector<8x8xbf16>, vector<8x8xbf16>, vector<8x8xf32> -> vector<8x8xf32>
    %42 = vector.extract_strided_slice %14 {offsets = [0, 8], sizes = [8, 8], strides = [1, 1]} : vector<8x96xf32> to vector<8x8xf32>
    %43 = vector.extract_strided_slice %14 {offsets = [0, 40], sizes = [8, 8], strides = [1, 1]} : vector<8x96xf32> to vector<8x8xf32>
    %44 = vector.extract_strided_slice %14 {offsets = [0, 72], sizes = [8, 8], strides = [1, 1]} : vector<8x96xf32> to vector<8x8xf32>
    %45 = tpu.transpose %43, [1, 0] : vector<8x8xf32> -> vector<8x8xf32>
    %46 = arith.truncf %42 : vector<8x8xf32> to vector<8x8xbf16>
    %47 = arith.truncf %45 : vector<8x8xf32> to vector<8x8xbf16>
    %cst_22 = arith.constant dense<0.000000e+00> : vector<8x8xf32>
    %48 = tpu.matmul %46, %47, %cst_22 {dimension_numbers = #tpu.dot_dimension_numbers<[1], [0], [0], [1], [0, 0, 1, 1], [], []>} : vector<8x8xbf16>, vector<8x8xbf16>, vector<8x8xf32> -> vector<8x8xf32>
    %cst_23 = arith.constant 0.353553385 : f32
    %49 = vector.broadcast %cst_23 : f32 to vector<8x8xf32>
    %50 = arith.mulf %48, %49 : vector<8x8xf32>
    %51 = vector.broadcast %5 : vector<1x8xf32> to vector<8x8xf32>
    %52 = arith.addf %50, %51 : vector<8x8xf32>
    %cst_24 = arith.constant dense<0xFF800000> : vector<8xf32>
    %53 = vector.multi_reduction <maximumf>, %52, %cst_24 [1] : vector<8x8xf32> to vector<8xf32>
    %54 = vector.shape_cast %53 : vector<8xf32> to vector<8x1xf32>
    %55 = vector.broadcast %54 : vector<8x1xf32> to vector<8x8xf32>
    %56 = arith.subf %52, %55 : vector<8x8xf32>
    %57 = math.exp %56 : vector<8x8xf32>
    %cst_25 = arith.constant dense<0.000000e+00> : vector<8xf32>
    %58 = vector.multi_reduction <add>, %57, %cst_25 [1] : vector<8x8xf32> to vector<8xf32>
    %59 = vector.shape_cast %58 : vector<8xf32> to vector<8x1xf32>
    %60 = tpu.reciprocal %59 {approx = true} : vector<8x1xf32> -> vector<8x1xf32>
    %61 = vector.broadcast %60 : vector<8x1xf32> to vector<8x8xf32>
    %62 = arith.mulf %57, %61 : vector<8x8xf32>
    %c0_26 = arith.constant 0 : index
    %c0_27 = arith.constant 0 : index
    %c1 = arith.constant 1 : index
    %c0_28 = arith.constant 0 : index
    %c0_29 = arith.constant 0 : index
    %63 = vector.load %arg18[%c0_26, %c0_27, %c1, %c0_28, %c0_29] : memref<1x1x4x8x8xf32, #tpu.memory_space<vmem>>, vector<1x1x1x8x8xf32>
    %64 = vector.shape_cast %63 : vector<1x1x1x8x8xf32> to vector<8x8xf32>
    %65 = vector.shape_cast %62 : vector<8x8xf32> to vector<1x1x1x8x8xf32>
    tpu.vector_store %arg18[%c0_26, %c0_27, %c1, %c0_28, %c0_29], %65 {strides = array<i32>} : memref<1x1x4x8x8xf32, #tpu.memory_space<vmem>>, vector<1x1x1x8x8xf32>,
    %66 = arith.truncf %62 : vector<8x8xf32> to vector<8x8xbf16>
    %67 = arith.truncf %44 : vector<8x8xf32> to vector<8x8xbf16>
    %cst_30 = arith.constant dense<0.000000e+00> : vector<8x8xf32>
    %68 = tpu.matmul %66, %67, %cst_30 {dimension_numbers = #tpu.dot_dimension_numbers<[1], [0], [0], [1], [0, 0, 1, 1], [], []>} : vector<8x8xbf16>, vector<8x8xbf16>, vector<8x8xf32> -> vector<8x8xf32>
    %69 = vector.extract_strided_slice %14 {offsets = [0, 16], sizes = [8, 8], strides = [1, 1]} : vector<8x96xf32> to vector<8x8xf32>
    %70 = vector.extract_strided_slice %14 {offsets = [0, 48], sizes = [8, 8], strides = [1, 1]} : vector<8x96xf32> to vector<8x8xf32>
    %71 = vector.extract_strided_slice %14 {offsets = [0, 80], sizes = [8, 8], strides = [1, 1]} : vector<8x96xf32> to vector<8x8xf32>
    %72 = tpu.transpose %70, [1, 0] : vector<8x8xf32> -> vector<8x8xf32>
    %73 = arith.truncf %69 : vector<8x8xf32> to vector<8x8xbf16>
    %74 = arith.truncf %72 : vector<8x8xf32> to vector<8x8xbf16>
    %cst_31 = arith.constant dense<0.000000e+00> : vector<8x8xf32>
    %75 = tpu.matmul %73, %74, %cst_31 {dimension_numbers = #tpu.dot_dimension_numbers<[1], [0], [0], [1], [0, 0, 1, 1], [], []>} : vector<8x8xbf16>, vector<8x8xbf16>, vector<8x8xf32> -> vector<8x8xf32>
    %cst_32 = arith.constant 0.353553385 : f32
    %76 = vector.broadcast %cst_32 : f32 to vector<8x8xf32>
    %77 = arith.mulf %75, %76 : vector<8x8xf32>
    %78 = vector.broadcast %5 : vector<1x8xf32> to vector<8x8xf32>
    %79 = arith.addf %77, %78 : vector<8x8xf32>
    %cst_33 = arith.constant dense<0xFF800000> : vector<8xf32>
    %80 = vector.multi_reduction <maximumf>, %79, %cst_33 [1] : vector<8x8xf32> to vector<8xf32>
    %81 = vector.shape_cast %80 : vector<8xf32> to vector<8x1xf32>
    %82 = vector.broadcast %81 : vector<8x1xf32> to vector<8x8xf32>
    %83 = arith.subf %79, %82 : vector<8x8xf32>
    %84 = math.exp %83 : vector<8x8xf32>
    %cst_34 = arith.constant dense<0.000000e+00> : vector<8xf32>
    %85 = vector.multi_reduction <add>, %84, %cst_34 [1] : vector<8x8xf32> to vector<8xf32>
    %86 = vector.shape_cast %85 : vector<8xf32> to vector<8x1xf32>
    %87 = tpu.reciprocal %86 {approx = true} : vector<8x1xf32> -> vector<8x1xf32>
    %88 = vector.broadcast %87 : vector<8x1xf32> to vector<8x8xf32>
    %89 = arith.mulf %84, %88 : vector<8x8xf32>
    %c0_35 = arith.constant 0 : index
    %c0_36 = arith.constant 0 : index
    %c2 = arith.constant 2 : index
    %c0_37 = arith.constant 0 : index
    %c0_38 = arith.constant 0 : index
    %90 = vector.load %arg18[%c0_35, %c0_36, %c2, %c0_37, %c0_38] : memref<1x1x4x8x8xf32, #tpu.memory_space<vmem>>, vector<1x1x1x8x8xf32>
    %91 = vector.shape_cast %90 : vector<1x1x1x8x8xf32> to vector<8x8xf32>
    %92 = vector.shape_cast %89 : vector<8x8xf32> to vector<1x1x1x8x8xf32>
    tpu.vector_store %arg18[%c0_35, %c0_36, %c2, %c0_37, %c0_38], %92 {strides = array<i32>} : memref<1x1x4x8x8xf32, #tpu.memory_space<vmem>>, vector<1x1x1x8x8xf32>,
    %93 = arith.truncf %89 : vector<8x8xf32> to vector<8x8xbf16>
    %94 = arith.truncf %71 : vector<8x8xf32> to vector<8x8xbf16>
    %cst_39 = arith.constant dense<0.000000e+00> : vector<8x8xf32>
    %95 = tpu.matmul %93, %94, %cst_39 {dimension_numbers = #tpu.dot_dimension_numbers<[1], [0], [0], [1], [0, 0, 1, 1], [], []>} : vector<8x8xbf16>, vector<8x8xbf16>, vector<8x8xf32> -> vector<8x8xf32>
    %96 = vector.extract_strided_slice %14 {offsets = [0, 24], sizes = [8, 8], strides = [1, 1]} : vector<8x96xf32> to vector<8x8xf32>
    %97 = vector.extract_strided_slice %14 {offsets = [0, 56], sizes = [8, 8], strides = [1, 1]} : vector<8x96xf32> to vector<8x8xf32>
    %98 = vector.extract_strided_slice %14 {offsets = [0, 88], sizes = [8, 8], strides = [1, 1]} : vector<8x96xf32> to vector<8x8xf32>
    %99 = tpu.transpose %97, [1, 0] : vector<8x8xf32> -> vector<8x8xf32>
    %100 = arith.truncf %96 : vector<8x8xf32> to vector<8x8xbf16>
    %101 = arith.truncf %99 : vector<8x8xf32> to vector<8x8xbf16>
    %cst_40 = arith.constant dense<0.000000e+00> : vector<8x8xf32>
    %102 = tpu.matmul %100, %101, %cst_40 {dimension_numbers = #tpu.dot_dimension_numbers<[1], [0], [0], [1], [0, 0, 1, 1], [], []>} : vector<8x8xbf16>, vector<8x8xbf16>, vector<8x8xf32> -> vector<8x8xf32>
    %cst_41 = arith.constant 0.353553385 : f32
    %103 = vector.broadcast %cst_41 : f32 to vector<8x8xf32>
    %104 = arith.mulf %102, %103 : vector<8x8xf32>
    %105 = vector.broadcast %5 : vector<1x8xf32> to vector<8x8xf32>
    %106 = arith.addf %104, %105 : vector<8x8xf32>
    %cst_42 = arith.constant dense<0xFF800000> : vector<8xf32>
    %107 = vector.multi_reduction <maximumf>, %106, %cst_42 [1] : vector<8x8xf32> to vector<8xf32>
    %108 = vector.shape_cast %107 : vector<8xf32> to vector<8x1xf32>
    %109 = vector.broadcast %108 : vector<8x1xf32> to vector<8x8xf32>
    %110 = arith.subf %106, %109 : vector<8x8xf32>
    %111 = math.exp %110 : vector<8x8xf32>
    %cst_43 = arith.constant dense<0.000000e+00> : vector<8xf32>
    %112 = vector.multi_reduction <add>, %111, %cst_43 [1] : vector<8x8xf32> to vector<8xf32>
    %113 = vector.shape_cast %112 : vector<8xf32> to vector<8x1xf32>
    %114 = tpu.reciprocal %113 {approx = true} : vector<8x1xf32> -> vector<8x1xf32>
    %115 = vector.broadcast %114 : vector<8x1xf32> to vector<8x8xf32>
    %116 = arith.mulf %111, %115 : vector<8x8xf32>
    %c0_44 = arith.constant 0 : index
    %c0_45 = arith.constant 0 : index
    %c3 = arith.constant 3 : index
    %c0_46 = arith.constant 0 : index
    %c0_47 = arith.constant 0 : index
    %117 = vector.load %arg18[%c0_44, %c0_45, %c3, %c0_46, %c0_47] : memref<1x1x4x8x8xf32, #tpu.memory_space<vmem>>, vector<1x1x1x8x8xf32>
    %118 = vector.shape_cast %117 : vector<1x1x1x8x8xf32> to vector<8x8xf32>
    %119 = vector.shape_cast %116 : vector<8x8xf32> to vector<1x1x1x8x8xf32>
    tpu.vector_store %arg18[%c0_44, %c0_45, %c3, %c0_46, %c0_47], %119 {strides = array<i32>} : memref<1x1x4x8x8xf32, #tpu.memory_space<vmem>>, vector<1x1x1x8x8xf32>,
    %120 = arith.truncf %116 : vector<8x8xf32> to vector<8x8xbf16>
    %121 = arith.truncf %98 : vector<8x8xf32> to vector<8x8xbf16>
    %cst_48 = arith.constant dense<0.000000e+00> : vector<8x8xf32>
    %122 = tpu.matmul %120, %121, %cst_48 {dimension_numbers = #tpu.dot_dimension_numbers<[1], [0], [0], [1], [0, 0, 1, 1], [], []>} : vector<8x8xbf16>, vector<8x8xbf16>, vector<8x8xf32> -> vector<8x8xf32>
    %123 = tpu.concatenate %41, %68, %95, %122 in 1 : vector<8x8xf32>, vector<8x8xf32>, vector<8x8xf32>, vector<8x8xf32> -> vector<8x32xf32>
    %c0_49 = arith.constant 0 : index
    %c0_50 = arith.constant 0 : index
    %c0_51 = arith.constant 0 : index
    %124 = vector.load %arg8[%c0_49, %c0_50, %c0_51] : memref<1x32x32xf32, #tpu.memory_space<vmem>>, vector<1x32x32xf32>
    %125 = vector.shape_cast %124 : vector<1x32x32xf32> to vector<32x32xf32>
    %126 = arith.truncf %123 : vector<8x32xf32> to vector<8x32xbf16>
    %127 = arith.truncf %125 : vector<32x32xf32> to vector<32x32xbf16>
    %cst_52 = arith.constant dense<0.000000e+00> : vector<8x32xf32>
    %128 = tpu.matmul %126, %127, %cst_52 {dimension_numbers = #tpu.dot_dimension_numbers<[1], [0], [0], [1], [0, 0, 1, 1], [], []>} : vector<8x32xbf16>, vector<32x32xbf16>, vector<8x32xf32> -> vector<8x32xf32>
    %c0_53 = arith.constant 0 : index
    %c0_54 = arith.constant 0 : index
    %c0_55 = arith.constant 0 : index
    %129 = vector.load %arg9[%c0_53, %c0_54, %c0_55] : memref<1x1x32xf32, #tpu.memory_space<vmem>>, vector<1x1x32xf32>
    %130 = vector.shape_cast %129 : vector<1x1x32xf32> to vector<1x32xf32>
    %131 = vector.broadcast %130 : vector<1x32xf32> to vector<8x32xf32>
    %132 = arith.addf %128, %131 : vector<8x32xf32>
    %133 = arith.addf %132, %3 : vector<8x32xf32>
    %c0_56 = arith.constant 0 : index
    %c0_57 = arith.constant 0 : index
    %c0_58 = arith.constant 0 : index
    %134 = vector.load %arg10[%c0_56, %c0_57, %c0_58] : memref<1x1x32xf32, #tpu.memory_space<vmem>>, vector<1x1x32xf32>
    %135 = vector.shape_cast %134 : vector<1x1x32xf32> to vector<1x32xf32>
    %c0_59 = arith.constant 0 : index
    %c0_60 = arith.constant 0 : index
    %c0_61 = arith.constant 0 : index
    %136 = vector.load %arg11[%c0_59, %c0_60, %c0_61] : memref<1x1x32xf32, #tpu.memory_space<vmem>>, vector<1x1x32xf32>
    %137 = vector.shape_cast %136 : vector<1x1x32xf32> to vector<1x32xf32>
    %cst_62 = arith.constant dense<0.000000e+00> : vector<8xf32>
    %138 = vector.multi_reduction <add>, %133, %cst_62 [1] : vector<8x32xf32> to vector<8xf32>
    %139 = vector.shape_cast %138 : vector<8xf32> to vector<8x1xf32>
    %cst_63 = arith.constant 3.200000e+01 : f32
    %140 = vector.broadcast %cst_63 : f32 to vector<8x1xf32>
    %141 = arith.divf %139, %140 : vector<8x1xf32>
    %142 = vector.broadcast %141 : vector<8x1xf32> to vector<8x32xf32>
    %143 = arith.subf %133, %142 : vector<8x32xf32>
    %144 = arith.mulf %143, %143 : vector<8x32xf32>
    %cst_64 = arith.constant dense<0.000000e+00> : vector<8xf32>
    %145 = vector.multi_reduction <add>, %144, %cst_64 [1] : vector<8x32xf32> to vector<8xf32>
    %146 = vector.shape_cast %145 : vector<8xf32> to vector<8x1xf32>
    %cst_65 = arith.constant 3.200000e+01 : f32
    %147 = vector.broadcast %cst_65 : f32 to vector<8x1xf32>
    %148 = arith.divf %146, %147 : vector<8x1xf32>
    %149 = vector.broadcast %141 : vector<8x1xf32> to vector<8x32xf32>
    %150 = arith.subf %133, %149 : vector<8x32xf32>
    %cst_66 = arith.constant 9.99999996E-13 : f32
    %151 = vector.broadcast %cst_66 : f32 to vector<8x1xf32>
    %152 = arith.addf %148, %151 : vector<8x1xf32>
    %153 = math.rsqrt %152 : vector<8x1xf32>
    %154 = vector.broadcast %153 : vector<8x1xf32> to vector<8x32xf32>
    %155 = arith.mulf %150, %154 : vector<8x32xf32>
    %156 = vector.broadcast %135 : vector<1x32xf32> to vector<8x32xf32>
    %157 = arith.mulf %155, %156 : vector<8x32xf32>
    %158 = vector.broadcast %137 : vector<1x32xf32> to vector<8x32xf32>
    %159 = arith.addf %157, %158 : vector<8x32xf32>
    %c0_67 = arith.constant 0 : index
    %c0_68 = arith.constant 0 : index
    %c0_69 = arith.constant 0 : index
    %160 = vector.load %arg12[%c0_67, %c0_68, %c0_69] : memref<1x32x64xf32, #tpu.memory_space<vmem>>, vector<1x32x64xf32>
    %161 = vector.shape_cast %160 : vector<1x32x64xf32> to vector<32x64xf32>
    %162 = arith.truncf %159 : vector<8x32xf32> to vector<8x32xbf16>
    %163 = arith.truncf %161 : vector<32x64xf32> to vector<32x64xbf16>
    %cst_70 = arith.constant dense<0.000000e+00> : vector<8x64xf32>
    %164 = tpu.matmul %162, %163, %cst_70 {dimension_numbers = #tpu.dot_dimension_numbers<[1], [0], [0], [1], [0, 0, 1, 1], [], []>} : vector<8x32xbf16>, vector<32x64xbf16>, vector<8x64xf32> -> vector<8x64xf32>
    %c0_71 = arith.constant 0 : index
    %c0_72 = arith.constant 0 : index
    %c0_73 = arith.constant 0 : index
    %165 = vector.load %arg13[%c0_71, %c0_72, %c0_73] : memref<1x1x64xf32, #tpu.memory_space<vmem>>, vector<1x1x64xf32>
    %166 = vector.shape_cast %165 : vector<1x1x64xf32> to vector<1x64xf32>
    %167 = vector.broadcast %166 : vector<1x64xf32> to vector<8x64xf32>
    %168 = arith.addf %164, %167 : vector<8x64xf32>
    %cst_74 = arith.constant 5.000000e-01 : f32
    %169 = vector.broadcast %cst_74 : f32 to vector<8x64xf32>
    %170 = arith.mulf %169, %168 : vector<8x64xf32>
    %cst_75 = arith.constant 0.707106769 : f32
    %171 = vector.broadcast %cst_75 : f32 to vector<8x64xf32>
    %172 = arith.mulf %168, %171 : vector<8x64xf32>
    %173 = math.erf %172 : vector<8x64xf32>
    %cst_76 = arith.constant 1.000000e+00 : f32
    %174 = vector.broadcast %cst_76 : f32 to vector<8x64xf32>
    %175 = arith.addf %174, %173 : vector<8x64xf32>
    %176 = arith.mulf %170, %175 : vector<8x64xf32>
    %c0_77 = arith.constant 0 : index
    %c0_78 = arith.constant 0 : index
    %c0_79 = arith.constant 0 : index
    %177 = vector.load %arg14[%c0_77, %c0_78, %c0_79] : memref<1x64x32xf32, #tpu.memory_space<vmem>>, vector<1x64x32xf32>
    %178 = vector.shape_cast %177 : vector<1x64x32xf32> to vector<64x32xf32>
    %179 = arith.truncf %176 : vector<8x64xf32> to vector<8x64xbf16>
    %180 = arith.truncf %178 : vector<64x32xf32> to vector<64x32xbf16>
    %cst_80 = arith.constant dense<0.000000e+00> : vector<8x32xf32>
    %181 = tpu.matmul %179, %180, %cst_80 {dimension_numbers = #tpu.dot_dimension_numbers<[1], [0], [0], [1], [0, 0, 1, 1], [], []>} : vector<8x64xbf16>, vector<64x32xbf16>, vector<8x32xf32> -> vector<8x32xf32>
    %c0_81 = arith.constant 0 : index
    %c0_82 = arith.constant 0 : index
    %c0_83 = arith.constant 0 : index
    %182 = vector.load %arg15[%c0_81, %c0_82, %c0_83] : memref<1x1x32xf32, #tpu.memory_space<vmem>>, vector<1x1x32xf32>
    %183 = vector.shape_cast %182 : vector<1x1x32xf32> to vector<1x32xf32>
    %184 = vector.broadcast %183 : vector<1x32xf32> to vector<8x32xf32>
    %185 = arith.addf %181, %184 : vector<8x32xf32>
    %186 = arith.addf %185, %159 : vector<8x32xf32>
    %c0_84 = arith.constant 0 : index
    %c0_85 = arith.constant 0 : index
    %c0_86 = arith.constant 0 : index
    %187 = vector.load %arg16[%c0_84, %c0_85, %c0_86] : memref<1x1x32xf32, #tpu.memory_space<vmem>>, vector<1x1x32xf32>
    %188 = vector.shape_cast %187 : vector<1x1x32xf32> to vector<1x32xf32>
    %c0_87 = arith.constant 0 : index
    %c0_88 = arith.constant 0 : index
    %c0_89 = arith.constant 0 : index
    %189 = vector.load %arg17[%c0_87, %c0_88, %c0_89] : memref<1x1x32xf32, #tpu.memory_space<vmem>>, vector<1x1x32xf32>
    %190 = vector.shape_cast %189 : vector<1x1x32xf32> to vector<1x32xf32>
    %cst_90 = arith.constant dense<0.000000e+00> : vector<8xf32>
    %191 = vector.multi_reduction <add>, %186, %cst_90 [1] : vector<8x32xf32> to vector<8xf32>
    %192 = vector.shape_cast %191 : vector<8xf32> to vector<8x1xf32>
    %cst_91 = arith.constant 3.200000e+01 : f32
    %193 = vector.broadcast %cst_91 : f32 to vector<8x1xf32>
    %194 = arith.divf %192, %193 : vector<8x1xf32>
    %195 = vector.broadcast %194 : vector<8x1xf32> to vector<8x32xf32>
    %196 = arith.subf %186, %195 : vector<8x32xf32>
    %197 = arith.mulf %196, %196 : vector<8x32xf32>
    %cst_92 = arith.constant dense<0.000000e+00> : vector<8xf32>
    %198 = vector.multi_reduction <add>, %197, %cst_92 [1] : vector<8x32xf32> to vector<8xf32>
    %199 = vector.shape_cast %198 : vector<8xf32> to vector<8x1xf32>
    %cst_93 = arith.constant 3.200000e+01 : f32
    %200 = vector.broadcast %cst_93 : f32 to vector<8x1xf32>
    %201 = arith.divf %199, %200 : vector<8x1xf32>
    %202 = vector.broadcast %194 : vector<8x1xf32> to vector<8x32xf32>
    %203 = arith.subf %186, %202 : vector<8x32xf32>
    %cst_94 = arith.constant 9.99999996E-13 : f32
    %204 = vector.broadcast %cst_94 : f32 to vector<8x1xf32>
    %205 = arith.addf %201, %204 : vector<8x1xf32>
    %206 = math.rsqrt %205 : vector<8x1xf32>
    %207 = vector.broadcast %206 : vector<8x1xf32> to vector<8x32xf32>
    %208 = arith.mulf %203, %207 : vector<8x32xf32>
    %209 = vector.broadcast %188 : vector<1x32xf32> to vector<8x32xf32>
    %210 = arith.mulf %208, %209 : vector<8x32xf32>
    %211 = vector.broadcast %190 : vector<1x32xf32> to vector<8x32xf32>
    %212 = arith.addf %210, %211 : vector<8x32xf32>
    %c0_95 = arith.constant 0 : index
    %c0_96 = arith.constant 0 : index
    %213 = vector.load %arg20[%c0_95, %c0_96] : memref<8x32xf32, #tpu.memory_space<vmem>>, vector<8x32xf32>
    tpu.vector_store %arg20[%c0_95, %c0_96], %212 {strides = array<i32>} : memref<8x32xf32, #tpu.memory_space<vmem>>, vector<8x32xf32>,
    %c0_97 = arith.constant 0 : index
    %c0_98 = arith.constant 0 : index
    %c0_99 = arith.constant 0 : index
    %c0_100 = arith.constant 0 : index
    %214 = vector.load %arg19[%c0_97, %c0_98, %c0_99, %c0_100] : memref<1x1x8x32xf32, #tpu.memory_space<vmem>>, vector<1x1x8x32xf32>
    %215 = vector.shape_cast %214 : vector<1x1x8x32xf32> to vector<8x32xf32>
    %216 = vector.shape_cast %212 : vector<8x32xf32> to vector<1x1x8x32xf32>
    tpu.vector_store %arg19[%c0_97, %c0_98, %c0_99, %c0_100], %216 {strides = array<i32>} : memref<1x1x8x32xf32, #tpu.memory_space<vmem>>, vector<1x1x8x32xf32>,
    return
  }
  func.func @transform_0(%arg0: i32, %arg1: i32) -> (i32, i32, i32) {
    %c0_i32 = arith.constant 0 : i32
    %c0_i32_0 = arith.constant 0 : i32
    %c0_i32_1 = arith.constant 0 : i32
    return %arg0, %c0_i32, %c0_i32_0 : i32, i32, i32
  }
  func.func @transform_1(%arg0: i32, %arg1: i32) -> (i32, i32, i32, i32) {
    %c0_i32 = arith.constant 0 : i32
    %c0_i32_0 = arith.constant 0 : i32
    %c0_i32_1 = arith.constant 0 : i32
    %c0_i32_2 = arith.constant 0 : i32
    return %arg0, %c0_i32, %c0_i32_0, %c0_i32_1 : i32, i32, i32, i32
  }
  func.func @transform_2(%arg0: i32, %arg1: i32) -> (i32, i32) {
    %c0_i32 = arith.constant 0 : i32
    %c0_i32_0 = arith.constant 0 : i32
    %c0_i32_1 = arith.constant 0 : i32
    return %c0_i32, %c0_i32_0 : i32, i32
  }
  func.func @transform_3(%arg0: i32, %arg1: i32) -> (i32, i32) {
    %c0_i32 = arith.constant 0 : i32
    %c0_i32_0 = arith.constant 0 : i32
    %c0_i32_1 = arith.constant 0 : i32
    return %c0_i32, %c0_i32_0 : i32, i32
  }
  func.func @transform_4(%arg0: i32, %arg1: i32) -> (i32, i32, i32) {
    %c0_i32 = arith.constant 0 : i32
    %c0_i32_0 = arith.constant 0 : i32
    %c0_i32_1 = arith.constant 0 : i32
    return %arg1, %c0_i32, %c0_i32_0 : i32, i32, i32
  }
  func.func @transform_5(%arg0: i32, %arg1: i32) -> (i32, i32, i32) {
    %c0_i32 = arith.constant 0 : i32
    %c0_i32_0 = arith.constant 0 : i32
    %c0_i32_1 = arith.constant 0 : i32
    return %arg1, %c0_i32, %c0_i32_0 : i32, i32, i32
  }
  func.func @transform_6(%arg0: i32, %arg1: i32) -> (i32, i32, i32) {
    %c0_i32 = arith.constant 0 : i32
    %c0_i32_0 = arith.constant 0 : i32
    %c0_i32_1 = arith.constant 0 : i32
    return %arg1, %c0_i32, %c0_i32_0 : i32, i32, i32
  }
  func.func @transform_7(%arg0: i32, %arg1: i32) -> (i32, i32, i32) {
    %c0_i32 = arith.constant 0 : i32
    %c0_i32_0 = arith.constant 0 : i32
    %c0_i32_1 = arith.constant 0 : i32
    return %arg1, %c0_i32, %c0_i32_0 : i32, i32, i32
  }
  func.func @transform_8(%arg0: i32, %arg1: i32) -> (i32, i32, i32) {
    %c0_i32 = arith.constant 0 : i32
    %c0_i32_0 = arith.constant 0 : i32
    %c0_i32_1 = arith.constant 0 : i32
    return %arg1, %c0_i32, %c0_i32_0 : i32, i32, i32
  }
  func.func @transform_9(%arg0: i32, %arg1: i32) -> (i32, i32, i32) {
    %c0_i32 = arith.constant 0 : i32
    %c0_i32_0 = arith.constant 0 : i32
    %c0_i32_1 = arith.constant 0 : i32
    return %arg1, %c0_i32, %c0_i32_0 : i32, i32, i32
  }
  func.func @transform_10(%arg0: i32, %arg1: i32) -> (i32, i32, i32) {
    %c0_i32 = arith.constant 0 : i32
    %c0_i32_0 = arith.constant 0 : i32
    %c0_i32_1 = arith.constant 0 : i32
    return %arg1, %c0_i32, %c0_i32_0 : i32, i32, i32
  }
  func.func @transform_11(%arg0: i32, %arg1: i32) -> (i32, i32, i32) {
    %c0_i32 = arith.constant 0 : i32
    %c0_i32_0 = arith.constant 0 : i32
    %c0_i32_1 = arith.constant 0 : i32
    return %arg1, %c0_i32, %c0_i32_0 : i32, i32, i32
  }
  func.func @transform_12(%arg0: i32, %arg1: i32) -> (i32, i32, i32) {
    %c0_i32 = arith.constant 0 : i32
    %c0_i32_0 = arith.constant 0 : i32
    %c0_i32_1 = arith.constant 0 : i32
    return %arg1, %c0_i32, %c0_i32_0 : i32, i32, i32
  }
  func.func @transform_13(%arg0: i32, %arg1: i32) -> (i32, i32, i32) {
    %c0_i32 = arith.constant 0 : i32
    %c0_i32_0 = arith.constant 0 : i32
    %c0_i32_1 = arith.constant 0 : i32
    return %arg1, %c0_i32, %c0_i32_0 : i32, i32, i32
  }
  func.func @transform_14(%arg0: i32, %arg1: i32) -> (i32, i32, i32) {
    %c0_i32 = arith.constant 0 : i32
    %c0_i32_0 = arith.constant 0 : i32
    %c0_i32_1 = arith.constant 0 : i32
    return %arg1, %c0_i32, %c0_i32_0 : i32, i32, i32
  }
  func.func @transform_15(%arg0: i32, %arg1: i32) -> (i32, i32, i32) {
    %c0_i32 = arith.constant 0 : i32
    %c0_i32_0 = arith.constant 0 : i32
    %c0_i32_1 = arith.constant 0 : i32
    return %arg1, %c0_i32, %c0_i32_0 : i32, i32, i32
  }
  func.func @transform_16(%arg0: i32, %arg1: i32) -> (i32, i32, i32, i32, i32) {
    %c0_i32 = arith.constant 0 : i32
    %c0_i32_0 = arith.constant 0 : i32
    %c0_i32_1 = arith.constant 0 : i32
    %c0_i32_2 = arith.constant 0 : i32
    return %arg1, %arg0, %c0_i32, %c0_i32_0, %c0_i32_1 : i32, i32, i32, i32, i32
  }
  func.func @transform_17(%arg0: i32, %arg1: i32) -> (i32, i32, i32, i32) {
    %c0_i32 = arith.constant 0 : i32
    %c0_i32_0 = arith.constant 0 : i32
    %c0_i32_1 = arith.constant 0 : i32
    return %arg1, %arg0, %c0_i32, %c0_i32_0 : i32, i32, i32, i32
  }
}

</mosaic_0001>

<llo_original>
// kernel: encoder_forward.1
$region0: #{encoder_forward.1}
  #allocation0 [shape = 'u32[]', space=smem, size = 0x4, offset = 0x4, fixed_abs, tag = 'smem constant byte address 0x4 - core index']
  #allocation1 [shape = 'u32[144,128]{1,0:T(1,128)}', space=vmem, size = 0x12000, scoped, tag = 'internal scratch']
  #allocation2 [shape = 'f32[8,32]{1,0:T(8,128)}', space=vmem, size = 0x1000, scoped, tag = 'scratch operand']
  %s0 = inlined_call_operand.hbm [shape: f32[2,8,32], index: 0, kind: input, shape index: {}]
  %s1 = inlined_call_operand.vmem [shape: f32[2,1,1,8], index: 1, kind: input, shape index: {}]
  %s2 = inlined_call_operand.vmem [shape: f32[1,32], index: 2, kind: input, shape index: {}]
  %s3 = inlined_call_operand.vmem [shape: f32[1,32], index: 3, kind: input, shape index: {}]
  %s4 = inlined_call_operand.vmem [shape: f32[2,32,96], index: 4, kind: input, shape index: {}]
  %s5 = inlined_call_operand.vmem [shape: f32[2,1,96], index: 5, kind: input, shape index: {}]
  %s6 = inlined_call_operand.vmem [shape: f32[2,32,32], index: 6, kind: input, shape index: {}]
  %s7 = inlined_call_operand.vmem [shape: f32[2,1,32], index: 7, kind: input, shape index: {}]
  %s8 = inlined_call_operand.vmem [shape: f32[2,1,32], index: 8, kind: input, shape index: {}]
  %s9 = inlined_call_operand.vmem [shape: f32[2,1,32], index: 9, kind: input, shape index: {}]
  %s10 = inlined_call_operand.vmem [shape: f32[2,32,64], index: 10, kind: input, shape index: {}]
  %s11 = inlined_call_operand.hbm [shape: f32[2,1,64], index: 11, kind: input, shape index: {}]
  %s12 = inlined_call_operand.vmem [shape: f32[2,64,32], index: 12, kind: input, shape index: {}]
  %s13 = inlined_call_operand.vmem [shape: f32[2,1,32], index: 13, kind: input, shape index: {}]
  %s14 = inlined_call_operand.vmem [shape: f32[2,1,32], index: 14, kind: input, shape index: {}]
  %s15 = inlined_call_operand.vmem [shape: f32[2,1,32], index: 15, kind: input, shape index: {}]
  %s16 = inlined_call_operand.vmem [shape: f32[2,2,4,8,8], index: 16, kind: output, shape index: {0}]
  %s17 = inlined_call_operand.vmem [shape: f32[2,2,8,32], index: 17, kind: output, shape index: {1}]
  %18 = xla_tuple %s16, %s17
  %s19 = sld [smem:[#allocation0]]
  $region117: #{encoder_forward.1} parent=0
    _
  %s21 = ssub.s32 1, %s19
  %s22 = scalar_select 0, %s21, %s19
  $region1: #{encoder_forward.1} parent=0
    #allocation3 [shape = 'u8[8192]{0}', space=vmem, size = 0x2000, scoped, tag = 'input window, operand 0']
    #allocation4 [shape = 's32[2]{0}', space=sflag, size = 0x8, scoped, tag = 'scoped memory for encoder_forward.1']
    #allocation5 [shape = 'u8[1024]{0}', space=vmem, size = 0x400, scoped, tag = 'input window, operand 11']
    #allocation6 [shape = 's32[2]{0}', space=sflag, size = 0x8, scoped, tag = 'scoped memory for encoder_forward.1']
    %23 = vsyncpa [#allocation4], 0
    %s24 = scalar_lea.sflag [#allocation4], 1
    %25 = vsyncpa %s24, 0
    %26 = vsyncpa [#allocation6], 0
    %s27 = scalar_lea.sflag [#allocation6], 1
    %28 = vsyncpa %s27, 0
    loop: start=0, step=1, limit=6
    $region2: #{encoder_forward.1} parent=1 // loop_pre_header
      _
    $region3: #{encoder_forward.1} parent=1 // loop_header
      %s30 = sphi 0, %s34
      %p31 = scmp.ge.s32.totalorder %s30, 6
      %s37 = sphi 0, %s49
      %s38 = sphi 0, %s45
      %s39 = sphi 0, %s37
      %s40 = sphi 0, %s38
      %s41 = sphi 0, %s39
      %s42 = sphi 0, %s40
      %s52 = sphi 0, %s54
      %s55 = sphi 0, %s52
      %s56 = sphi 0, %s55
      %s72 = sphi 0, %s56
      %s78 = sphi 0, %s80
      %s81 = sphi 0, %s78
      %s82 = sphi 0, %s81
      %s98 = sphi 0, %s82
      %s102 = sphi 0, %s102
      %s104 = sphi 0, %s102
      %s105 = sphi 0, %s104
      %s119 = sphi 0, %s105
      %s123 = sphi 0, %s123
      %s125 = sphi 0, %s123
      %s126 = sphi 0, %s125
      %s140 = sphi 0, %s126
      %s146 = sphi 0, %s148
      %s149 = sphi 0, %s146
      %s150 = sphi 0, %s149
      %s166 = sphi 0, %s150
      %s172 = sphi 0, %s174
      %s175 = sphi 0, %s172
      %s176 = sphi 0, %s175
      %s192 = sphi 0, %s176
      %s198 = sphi 0, %s200
      %s201 = sphi 0, %s198
      %s202 = sphi 0, %s201
      %s218 = sphi 0, %s202
      %s224 = sphi 0, %s226
      %s227 = sphi 0, %s224
      %s228 = sphi 0, %s227
      %s244 = sphi 0, %s228
      %s250 = sphi 0, %s252
      %s253 = sphi 0, %s250
      %s254 = sphi 0, %s253
      %s270 = sphi 0, %s254
      %s276 = sphi 0, %s278
      %s279 = sphi 0, %s276
      %s280 = sphi 0, %s279
      %s296 = sphi 0, %s280
      %s302 = sphi 0, %s304
      %s305 = sphi 0, %s302
      %s306 = sphi 0, %s305
      %s322 = sphi 0, %s306
      %s328 = sphi 0, %s330
      %s331 = sphi 0, %s328
      %s332 = sphi 0, %s331
      %s348 = sphi 0, %s332
      %s354 = sphi 0, %s356
      %s357 = sphi 0, %s354
      %s358 = sphi 0, %s357
      %s374 = sphi 0, %s358
      %s380 = sphi 0, %s382
      %s383 = sphi 0, %s380
      %s384 = sphi 0, %s383
      %s400 = sphi 0, %s384
      %s406 = sphi 0, %s408
      %s409 = sphi 0, %s406
      %s410 = sphi 0, %s409
      %s426 = sphi 0, %s410
      %s432 = sphi 0, %s434
      %s435 = sphi 0, %s432
      %s436 = sphi 0, %s435
      %s452 = sphi 0, %s436
      %s460 = sphi 0, %s462
      %s463 = sphi 0, %s460
      %s464 = sphi 0, %s463
      %s480 = sphi 0, %s464
      %s488 = sphi 0, %s490
      %s491 = sphi 0, %s488
      %s492 = sphi 0, %s491
      %s508 = sphi 0, %s492
    $region4: #{encoder_forward.1} parent=1 // loop_header_branch
      %33 = sbr.rel (%p31) target = $region8
    $region5: #{encoder_forward.1} parent=1 // loop_body
      %s35 = ssub.s32 %s30, 1
      %s36 = ssub.s32 %s30, 2
      %s43 = sadd.s32 1, %s38
      %p44 = scmp.ge.s32.totalorder %s43, 2
      %s45 = scalar_select %p44, 0, %s43
      %s46 = sadd.s32 1, %s37
      %s47 = scalar_select %p44, %s46, %s37
      %p48 = scmp.ge.s32.totalorder %s47, 2
      %s49 = scalar_select %p48, 0, %s47
      %s50 = ssub.s32 %s37, %s49
      %p51 = scmp.eq.s32.totalorder %s50, 0
      %s53 = sadd.s32 %s52, 1
      %s54 = scalar_select %p51, %s52, %s53
      %p57 = pneg %p51
      %p58 = scmp.eq.s32.totalorder %s30, 3
      %p59 = por %p57, %p58
      %p60 = scmp.ne.s32.totalorder %s52, %s55
      %p61 = scmp.eq.s32.totalorder %s30, 0
      %p62 = por %p60, %p61
      %p63 = scmp.ne.s32.totalorder %s52, %s55
      %p64 = scmp.eq.s32.totalorder %s35, 3
      %p65 = por %p63, %p64
      %p66 = scmp.ne.s32.totalorder %s55, %s56
      %p67 = scmp.eq.s32.totalorder %s35, 0
      %p68 = por %p66, %p67
      %p69 = scmp.ne.s32.totalorder %s55, %s56
      %p70 = scmp.eq.s32.totalorder %s36, 3
      %p71 = por %p69, %p70
      %p73 = scmp.ne.s32.totalorder %s56, %s72
      %p74 = scmp.eq.s32.totalorder %s36, 0
      %p75 = por %p73, %p74
      %s76 = ssub.s32 %s37, %s49
      %p77 = scmp.eq.s32.totalorder %s76, 0
      %s79 = sadd.s32 %s78, 1
      %s80 = scalar_select %p77, %s78, %s79
      %p83 = pneg %p77
      %p84 = scmp.eq.s32.totalorder %s30, 3
      %p85 = por %p83, %p84
      %p86 = scmp.ne.s32.totalorder %s78, %s81
      %p87 = scmp.eq.s32.totalorder %s30, 0
      %p88 = por %p86, %p87
      %p89 = scmp.ne.s32.totalorder %s78, %s81
      %p90 = scmp.eq.s32.totalorder %s35, 3
      %p91 = por %p89, %p90
      %p92 = scmp.ne.s32.totalorder %s81, %s82
      %p93 = scmp.eq.s32.totalorder %s35, 0
      %p94 = por %p92, %p93
      %p95 = scmp.ne.s32.totalorder %s81, %s82
      %p96 = scmp.eq.s32.totalorder %s36, 3
      %p97 = por %p95, %p96
      %p99 = scmp.ne.s32.totalorder %s82, %s98
      %p100 = scmp.eq.s32.totalorder %s36, 0
      %p101 = por %p99, %p100
      %s103 = sadd.s32 %s102, 1
      %p106 = scmp.eq.s32.totalorder %s30, 3
      %p107 = scmp.ne.s32.totalorder %s102, %s104
      %p108 = scmp.eq.s32.totalorder %s30, 0
      %p109 = por %p107, %p108
      %p110 = scmp.ne.s32.totalorder %s102, %s104
      %p111 = scmp.eq.s32.totalorder %s35, 3
      %p112 = por %p110, %p111
      %p113 = scmp.ne.s32.totalorder %s104, %s105
      %p114 = scmp.eq.s32.totalorder %s35, 0
      %p115 = por %p113, %p114
      %p116 = scmp.ne.s32.totalorder %s104, %s105
      %p117 = scmp.eq.s32.totalorder %s36, 3
      %p118 = por %p116, %p117
      %p120 = scmp.ne.s32.totalorder %s105, %s119
      %p121 = scmp.eq.s32.totalorder %s36, 0
      %p122 = por %p120, %p121
      %s124 = sadd.s32 %s123, 1
      %p127 = scmp.eq.s32.totalorder %s30, 3
      %p128 = scmp.ne.s32.totalorder %s123, %s125
      %p129 = scmp.eq.s32.totalorder %s30, 0
      %p130 = por %p128, %p129
      %p131 = scmp.ne.s32.totalorder %s123, %s125
      %p132 = scmp.eq.s32.totalorder %s35, 3
      %p133 = por %p131, %p132
      %p134 = scmp.ne.s32.totalorder %s125, %s126
      %p135 = scmp.eq.s32.totalorder %s35, 0
      %p136 = por %p134, %p135
      %p137 = scmp.ne.s32.totalorder %s125, %s126
      %p138 = scmp.eq.s32.totalorder %s36, 3
      %p139 = por %p137, %p138
      %p141 = scmp.ne.s32.totalorder %s126, %s140
      %p142 = scmp.eq.s32.totalorder %s36, 0
      %p143 = por %p141, %p142
      %s144 = ssub.s32 %s38, %s45
      %p145 = scmp.eq.s32.totalorder %s144, 0
      %s147 = sadd.s32 %s146, 1
      %s148 = scalar_select %p145, %s146, %s147
      %p151 = pneg %p145
      %p152 = scmp.eq.s32.totalorder %s30, 3
      %p153 = por %p151, %p152
      %p154 = scmp.ne.s32.totalorder %s146, %s149
      %p155 = scmp.eq.s32.totalorder %s30, 0
      %p156 = por %p154, %p155
      %p157 = scmp.ne.s32.totalorder %s146, %s149
      %p158 = scmp.eq.s32.totalorder %s35, 3
      %p159 = por %p157, %p158
      %p160 = scmp.ne.s32.totalorder %s149, %s150
      %p161 = scmp.eq.s32.totalorder %s35, 0
      %p162 = por %p160, %p161
      %p163 = scmp.ne.s32.totalorder %s149, %s150
      %p164 = scmp.eq.s32.totalorder %s36, 3
      %p165 = por %p163, %p164
      %p167 = scmp.ne.s32.totalorder %s150, %s166
      %p168 = scmp.eq.s32.totalorder %s36, 0
      %p169 = por %p167, %p168
      %s170 = ssub.s32 %s38, %s45
      %p171 = scmp.eq.s32.totalorder %s170, 0
      %s173 = sadd.s32 %s172, 1
      %s174 = scalar_select %p171, %s172, %s173
      %p177 = pneg %p171
      %p178 = scmp.eq.s32.totalorder %s30, 3
      %p179 = por %p177, %p178
      %p180 = scmp.ne.s32.totalorder %s172, %s175
      %p181 = scmp.eq.s32.totalorder %s30, 0
      %p182 = por %p180, %p181
      %p183 = scmp.ne.s32.totalorder %s172, %s175
      %p184 = scmp.eq.s32.totalorder %s35, 3
      %p185 = por %p183, %p184
      %p186 = scmp.ne.s32.totalorder %s175, %s176
      %p187 = scmp.eq.s32.totalorder %s35, 0
      %p188 = por %p186, %p187
      %p189 = scmp.ne.s32.totalorder %s175, %s176
      %p190 = scmp.eq.s32.totalorder %s36, 3
      %p191 = por %p189, %p190
      %p193 = scmp.ne.s32.totalorder %s176, %s192
      %p194 = scmp.eq.s32.totalorder %s36, 0
      %p195 = por %p193, %p194
      %s196 = ssub.s32 %s38, %s45
      %p197 = scmp.eq.s32.totalorder %s196, 0
      %s199 = sadd.s32 %s198, 1
      %s200 = scalar_select %p197, %s198, %s199
      %p203 = pneg %p197
      %p204 = scmp.eq.s32.totalorder %s30, 3
      %p205 = por %p203, %p204
      %p206 = scmp.ne.s32.totalorder %s198, %s201
      %p207 = scmp.eq.s32.totalorder %s30, 0
      %p208 = por %p206, %p207
      %p209 = scmp.ne.s32.totalorder %s198, %s201
      %p210 = scmp.eq.s32.totalorder %s35, 3
      %p211 = por %p209, %p210
      %p212 = scmp.ne.s32.totalorder %s201, %s202
      %p213 = scmp.eq.s32.totalorder %s35, 0
      %p214 = por %p212, %p213
      %p215 = scmp.ne.s32.totalorder %s201, %s202
      %p216 = scmp.eq.s32.totalorder %s36, 3
      %p217 = por %p215, %p216
      %p219 = scmp.ne.s32.totalorder %s202, %s218
      %p220 = scmp.eq.s32.totalorder %s36, 0
      %p221 = por %p219, %p220
      %s222 = ssub.s32 %s38, %s45
      %p223 = scmp.eq.s32.totalorder %s222, 0
      %s225 = sadd.s32 %s224, 1
      %s226 = scalar_select %p223, %s224, %s225
      %p229 = pneg %p223
      %p230 = scmp.eq.s32.totalorder %s30, 3
      %p231 = por %p229, %p230
      %p232 = scmp.ne.s32.totalorder %s224, %s227
      %p233 = scmp.eq.s32.totalorder %s30, 0
      %p234 = por %p232, %p233
      %p235 = scmp.ne.s32.totalorder %s224, %s227
      %p236 = scmp.eq.s32.totalorder %s35, 3
      %p237 = por %p235, %p236
      %p238 = scmp.ne.s32.totalorder %s227, %s228
      %p239 = scmp.eq.s32.totalorder %s35, 0
      %p240 = por %p238, %p239
      %p241 = scmp.ne.s32.totalorder %s227, %s228
      %p242 = scmp.eq.s32.totalorder %s36, 3
      %p243 = por %p241, %p242
      %p245 = scmp.ne.s32.totalorder %s228, %s244
      %p246 = scmp.eq.s32.totalorder %s36, 0
      %p247 = por %p245, %p246
      %s248 = ssub.s32 %s38, %s45
      %p249 = scmp.eq.s32.totalorder %s248, 0
      %s251 = sadd.s32 %s250, 1
      %s252 = scalar_select %p249, %s250, %s251
      %p255 = pneg %p249
      %p256 = scmp.eq.s32.totalorder %s30, 3
      %p257 = por %p255, %p256
      %p258 = scmp.ne.s32.totalorder %s250, %s253
      %p259 = scmp.eq.s32.totalorder %s30, 0
      %p260 = por %p258, %p259
      %p261 = scmp.ne.s32.totalorder %s250, %s253
      %p262 = scmp.eq.s32.totalorder %s35, 3
      %p263 = por %p261, %p262
      %p264 = scmp.ne.s32.totalorder %s253, %s254
      %p265 = scmp.eq.s32.totalorder %s35, 0
      %p266 = por %p264, %p265
      %p267 = scmp.ne.s32.totalorder %s253, %s254
      %p268 = scmp.eq.s32.totalorder %s36, 3
      %p269 = por %p267, %p268
      %p271 = scmp.ne.s32.totalorder %s254, %s270
      %p272 = scmp.eq.s32.totalorder %s36, 0
      %p273 = por %p271, %p272
      %s274 = ssub.s32 %s38, %s45
      %p275 = scmp.eq.s32.totalorder %s274, 0
      %s277 = sadd.s32 %s276, 1
      %s278 = scalar_select %p275, %s276, %s277
      %p281 = pneg %p275
      %p282 = scmp.eq.s32.totalorder %s30, 3
      %p283 = por %p281, %p282
      %p284 = scmp.ne.s32.totalorder %s276, %s279
      %p285 = scmp.eq.s32.totalorder %s30, 0
      %p286 = por %p284, %p285
      %p287 = scmp.ne.s32.totalorder %s276, %s279
      %p288 = scmp.eq.s32.totalorder %s35, 3
      %p289 = por %p287, %p288
      %p290 = scmp.ne.s32.totalorder %s279, %s280
      %p291 = scmp.eq.s32.totalorder %s35, 0
      %p292 = por %p290, %p291
      %p293 = scmp.ne.s32.totalorder %s279, %s280
      %p294 = scmp.eq.s32.totalorder %s36, 3
      %p295 = por %p293, %p294
      %p297 = scmp.ne.s32.totalorder %s280, %s296
      %p298 = scmp.eq.s32.totalorder %s36, 0
      %p299 = por %p297, %p298
      %s300 = ssub.s32 %s38, %s45
      %p301 = scmp.eq.s32.totalorder %s300, 0
      %s303 = sadd.s32 %s302, 1
      %s304 = scalar_select %p301, %s302, %s303
      %p307 = pneg %p301
      %p308 = scmp.eq.s32.totalorder %s30, 3
      %p309 = por %p307, %p308
      %p310 = scmp.ne.s32.totalorder %s302, %s305
      %p311 = scmp.eq.s32.totalorder %s30, 0
      %p312 = por %p310, %p311
      %p313 = scmp.ne.s32.totalorder %s302, %s305
      %p314 = scmp.eq.s32.totalorder %s35, 3
      %p315 = por %p313, %p314
      %p316 = scmp.ne.s32.totalorder %s305, %s306
      %p317 = scmp.eq.s32.totalorder %s35, 0
      %p318 = por %p316, %p317
      %p319 = scmp.ne.s32.totalorder %s305, %s306
      %p320 = scmp.eq.s32.totalorder %s36, 3
      %p321 = por %p319, %p320
      %p323 = scmp.ne.s32.totalorder %s306, %s322
      %p324 = scmp.eq.s32.totalorder %s36, 0
      %p325 = por %p323, %p324
      %s326 = ssub.s32 %s38, %s45
      %p327 = scmp.eq.s32.totalorder %s326, 0
      %s329 = sadd.s32 %s328, 1
      %s330 = scalar_select %p327, %s328, %s329
      %p333 = pneg %p327
      %p334 = scmp.eq.s32.totalorder %s30, 3
      %p335 = por %p333, %p334
      %p336 = scmp.ne.s32.totalorder %s328, %s331
      %p337 = scmp.eq.s32.totalorder %s30, 0
      %p338 = por %p336, %p337
      %p339 = scmp.ne.s32.totalorder %s328, %s331
      %p340 = scmp.eq.s32.totalorder %s35, 3
      %p341 = por %p339, %p340
      %p342 = scmp.ne.s32.totalorder %s331, %s332
      %p343 = scmp.eq.s32.totalorder %s35, 0
      %p344 = por %p342, %p343
      %p345 = scmp.ne.s32.totalorder %s331, %s332
      %p346 = scmp.eq.s32.totalorder %s36, 3
      %p347 = por %p345, %p346
      %p349 = scmp.ne.s32.totalorder %s332, %s348
      %p350 = scmp.eq.s32.totalorder %s36, 0
      %p351 = por %p349, %p350
      %s352 = ssub.s32 %s38, %s45
      %p353 = scmp.eq.s32.totalorder %s352, 0
      %s355 = sadd.s32 %s354, 1
      %s356 = scalar_select %p353, %s354, %s355
      %p359 = pneg %p353
      %p360 = scmp.eq.s32.totalorder %s30, 3
      %p361 = por %p359, %p360
      %p362 = scmp.ne.s32.totalorder %s354, %s357
      %p363 = scmp.eq.s32.totalorder %s30, 0
      %p364 = por %p362, %p363
      %p365 = scmp.ne.s32.totalorder %s354, %s357
      %p366 = scmp.eq.s32.totalorder %s35, 3
      %p367 = por %p365, %p366
      %p368 = scmp.ne.s32.totalorder %s357, %s358
      %p369 = scmp.eq.s32.totalorder %s35, 0
      %p370 = por %p368, %p369
      %p371 = scmp.ne.s32.totalorder %s357, %s358
      %p372 = scmp.eq.s32.totalorder %s36, 3
      %p373 = por %p371, %p372
      %p375 = scmp.ne.s32.totalorder %s358, %s374
      %p376 = scmp.eq.s32.totalorder %s36, 0
      %p377 = por %p375, %p376
      %s378 = ssub.s32 %s38, %s45
      %p379 = scmp.eq.s32.totalorder %s378, 0
      %s381 = sadd.s32 %s380, 1
      %s382 = scalar_select %p379, %s380, %s381
      %p385 = pneg %p379
      %p386 = scmp.eq.s32.totalorder %s30, 3
      %p387 = por %p385, %p386
      %p388 = scmp.ne.s32.totalorder %s380, %s383
      %p389 = scmp.eq.s32.totalorder %s30, 0
      %p390 = por %p388, %p389
      %p391 = scmp.ne.s32.totalorder %s380, %s383
      %p392 = scmp.eq.s32.totalorder %s35, 3
      %p393 = por %p391, %p392
      %p394 = scmp.ne.s32.totalorder %s383, %s384
      %p395 = scmp.eq.s32.totalorder %s35, 0
      %p396 = por %p394, %p395
      %p397 = scmp.ne.s32.totalorder %s383, %s384
      %p398 = scmp.eq.s32.totalorder %s36, 3
      %p399 = por %p397, %p398
      %p401 = scmp.ne.s32.totalorder %s384, %s400
      %p402 = scmp.eq.s32.totalorder %s36, 0
      %p403 = por %p401, %p402
      %s404 = ssub.s32 %s38, %s45
      %p405 = scmp.eq.s32.totalorder %s404, 0
      %s407 = sadd.s32 %s406, 1
      %s408 = scalar_select %p405, %s406, %s407
      %p411 = pneg %p405
      %p412 = scmp.eq.s32.totalorder %s30, 3
      %p413 = por %p411, %p412
      %p414 = scmp.ne.s32.totalorder %s406, %s409
      %p415 = scmp.eq.s32.totalorder %s30, 0
      %p416 = por %p414, %p415
      %p417 = scmp.ne.s32.totalorder %s406, %s409
      %p418 = scmp.eq.s32.totalorder %s35, 3
      %p419 = por %p417, %p418
      %p420 = scmp.ne.s32.totalorder %s409, %s410
      %p421 = scmp.eq.s32.totalorder %s35, 0
      %p422 = por %p420, %p421
      %p423 = scmp.ne.s32.totalorder %s409, %s410
      %p424 = scmp.eq.s32.totalorder %s36, 3
      %p425 = por %p423, %p424
      %p427 = scmp.ne.s32.totalorder %s410, %s426
      %p428 = scmp.eq.s32.totalorder %s36, 0
      %p429 = por %p427, %p428
      %s430 = ssub.s32 %s38, %s45
      %p431 = scmp.eq.s32.totalorder %s430, 0
      %s433 = sadd.s32 %s432, 1
      %s434 = scalar_select %p431, %s432, %s433
      %p437 = pneg %p431
      %p438 = scmp.eq.s32.totalorder %s30, 3
      %p439 = por %p437, %p438
      %p440 = scmp.ne.s32.totalorder %s432, %s435
      %p441 = scmp.eq.s32.totalorder %s30, 0
      %p442 = por %p440, %p441
      %p443 = scmp.ne.s32.totalorder %s432, %s435
      %p444 = scmp.eq.s32.totalorder %s35, 3
      %p445 = por %p443, %p444
      %p446 = scmp.ne.s32.totalorder %s435, %s436
      %p447 = scmp.eq.s32.totalorder %s35, 0
      %p448 = por %p446, %p447
      %p449 = scmp.ne.s32.totalorder %s435, %s436
      %p450 = scmp.eq.s32.totalorder %s36, 3
      %p451 = por %p449, %p450
      %p453 = scmp.ne.s32.totalorder %s436, %s452
      %p454 = scmp.eq.s32.totalorder %s36, 0
      %p455 = por %p453, %p454
      %s456 = ssub.s32 %s38, %s45
      %s457 = ssub.s32 %s37, %s49
      %s458 = sor.u32 %s456, %s457
      %p459 = scmp.eq.s32.totalorder %s458, 0
      %s461 = sadd.s32 %s460, 1
      %s462 = scalar_select %p459, %s460, %s461
      %p465 = pneg %p459
      %p466 = scmp.eq.s32.totalorder %s30, 3
      %p467 = por %p465, %p466
      %p468 = scmp.ne.s32.totalorder %s460, %s463
      %p469 = scmp.eq.s32.totalorder %s30, 0
      %p470 = por %p468, %p469
      %p471 = scmp.ne.s32.totalorder %s460, %s463
      %p472 = scmp.eq.s32.totalorder %s35, 3
      %p473 = por %p471, %p472
      %p474 = scmp.ne.s32.totalorder %s463, %s464
      %p475 = scmp.eq.s32.totalorder %s35, 0
      %p476 = por %p474, %p475
      %p477 = scmp.ne.s32.totalorder %s463, %s464
      %p478 = scmp.eq.s32.totalorder %s36, 3
      %p479 = por %p477, %p478
      %p481 = scmp.ne.s32.totalorder %s464, %s480
      %p482 = scmp.eq.s32.totalorder %s36, 0
      %p483 = por %p481, %p482
      %s484 = ssub.s32 %s38, %s45
      %s485 = ssub.s32 %s37, %s49
      %s486 = sor.u32 %s484, %s485
      %p487 = scmp.eq.s32.totalorder %s486, 0
      %s489 = sadd.s32 %s488, 1
      %s490 = scalar_select %p487, %s488, %s489
      %p493 = pneg %p487
      %p494 = scmp.eq.s32.totalorder %s30, 3
      %p495 = por %p493, %p494
      %p496 = scmp.ne.s32.totalorder %s488, %s491
      %p497 = scmp.eq.s32.totalorder %s30, 0
      %p498 = por %p496, %p497
      %p499 = scmp.ne.s32.totalorder %s488, %s491
      %p500 = scmp.eq.s32.totalorder %s35, 3
      %p501 = por %p499, %p500
      %p502 = scmp.ne.s32.totalorder %s491, %s492
      %p503 = scmp.eq.s32.totalorder %s35, 0
      %p504 = por %p502, %p503
      %p505 = scmp.ne.s32.totalorder %s491, %s492
      %p506 = scmp.eq.s32.totalorder %s36, 3
      %p507 = por %p505, %p506
      %p509 = scmp.ne.s32.totalorder %s492, %s508
      %p510 = scmp.eq.s32.totalorder %s36, 0
      %p511 = por %p509, %p510
      %p512 = scmp.le.s32.totalorder 1, %s30
      %p513 = scmp.lt.s32.totalorder %s30, 5
      %p514 = pnand %p512, %p513
      %p515 = pneg %p514
      // Predicated region
      $region9: #{encoder_forward.1} parent=5 // pred_check
        _
      $region10: #{encoder_forward.1} parent=5 // pred_check_branch
        %517 = sbr.rel (%p514) target = $region12
      $region11: #{encoder_forward.1} parent=5 // pred_region
        %s518 = ssub.s32 %s30, 1
        // Predicated region
        $region13: #{encoder_forward.1} parent=11 // pred_check
          %p519 = pneg %p115
        $region14: #{encoder_forward.1} parent=11 // pred_check_branch
          %521 = sbr.rel (%p519) target = $region16
        $region15: #{encoder_forward.1} parent=11 // pred_region
          _
        $region16: #{encoder_forward.1} parent=11 // pred_fallthru
          _
        // Predicated region
        $region17: #{encoder_forward.1} parent=11 // pred_check
          %p522 = pneg %p136
        $region18: #{encoder_forward.1} parent=11 // pred_check_branch
          %524 = sbr.rel (%p522) target = $region20
        $region19: #{encoder_forward.1} parent=11 // pred_region
          _
        $region20: #{encoder_forward.1} parent=11 // pred_fallthru
          _
      $region12: #{encoder_forward.1} parent=5 // pred_fallthru
        _
      %p525 = scmp.lt.s32.totalorder %s30, 4
      // Predicated region
      $region21: #{encoder_forward.1} parent=5 // pred_check
        %p526 = pneg %p525
      $region22: #{encoder_forward.1} parent=5 // pred_check_branch
        %528 = sbr.rel (%p526) target = $region24
      $region23: #{encoder_forward.1} parent=5 // pred_region
        // Predicated region
        $region25: #{encoder_forward.1} parent=23 // pred_check
          %p529 = pneg %p62
        $region26: #{encoder_forward.1} parent=23 // pred_check_branch
          %531 = sbr.rel (%p529) target = $region28
        $region27: #{encoder_forward.1} parent=23 // pred_region
          %s532 = sand.u32 %s52, 1
          %s533 = scalar_lea.sflag [#allocation4], %s532
          %s534 = sand.u32 %s52, 1
          %s535 = smul.addr %s534, 8
          %s536 = scalar_lea.vmem [#allocation3], %s535
          %s538 = ssub.s32 128, 128
          %539 = vsyncadd %s533, %s538
          %s540 = smul.addr %s37, 128
          %s541 = scalar_lea.hbm %s0, %s540
          %s543 = sshll.u32 %s536, 4
          %s544 = int_to_ptr.vmem [resolvable:$true] %s543
          %546 = dma.hbm_to_vmem [thread:$0]  %s541, 128, %s544, %s533
        $region28: #{encoder_forward.1} parent=23 // pred_fallthru
          _
        // Predicated region
        $region29: #{encoder_forward.1} parent=23 // pred_check
          %p547 = pneg %p88
        $region30: #{encoder_forward.1} parent=23 // pred_check_branch
          %549 = sbr.rel (%p547) target = $region32
        $region31: #{encoder_forward.1} parent=23 // pred_region
          %p550 = scmp.lt.s32.totalorder %s37, 1
          %s551 = scalar_select %p550, %s37, 1
          %s552 = scalar_lea.vmem %s1, %s551
        $region32: #{encoder_forward.1} parent=23 // pred_fallthru
          _
        // Predicated region
        $region33: #{encoder_forward.1} parent=23 // pred_check
          %p553 = pneg %p156
        $region34: #{encoder_forward.1} parent=23 // pred_check_branch
          %555 = sbr.rel (%p553) target = $region36
        $region35: #{encoder_forward.1} parent=23 // pred_region
          %p556 = scmp.lt.s32.totalorder %s38, 1
          %s557 = scalar_select %p556, %s38, 1
          %s558 = smul.addr %s557, 4
          %s559 = smul.addr %s558, 8
          %s560 = scalar_lea.vmem %s4, %s559
        $region36: #{encoder_forward.1} parent=23 // pred_fallthru
          _
        // Predicated region
        $region37: #{encoder_forward.1} parent=23 // pred_check
          %p561 = pneg %p182
        $region38: #{encoder_forward.1} parent=23 // pred_check_branch
          %563 = sbr.rel (%p561) target = $region40
        $region39: #{encoder_forward.1} parent=23 // pred_region
          %p564 = scmp.lt.s32.totalorder %s38, 1
          %s565 = scalar_select %p564, %s38, 1
          %s566 = scalar_lea.vmem %s5, %s565
        $region40: #{encoder_forward.1} parent=23 // pred_fallthru
          _
        // Predicated region
        $region41: #{encoder_forward.1} parent=23 // pred_check
          %p567 = pneg %p208
        $region42: #{encoder_forward.1} parent=23 // pred_check_branch
          %569 = sbr.rel (%p567) target = $region44
        $region43: #{encoder_forward.1} parent=23 // pred_region
          %p570 = scmp.lt.s32.totalorder %s38, 1
          %s571 = scalar_select %p570, %s38, 1
          %s572 = smul.addr %s571, 4
          %s573 = smul.addr %s572, 8
          %s574 = scalar_lea.vmem %s6, %s573
        $region44: #{encoder_forward.1} parent=23 // pred_fallthru
          _
        // Predicated region
        $region45: #{encoder_forward.1} parent=23 // pred_check
          %p575 = pneg %p234
        $region46: #{encoder_forward.1} parent=23 // pred_check_branch
          %577 = sbr.rel (%p575) target = $region48
        $region47: #{encoder_forward.1} parent=23 // pred_region
          %p578 = scmp.lt.s32.totalorder %s38, 1
          %s579 = scalar_select %p578, %s38, 1
          %s580 = scalar_lea.vmem %s7, %s579
        $region48: #{encoder_forward.1} parent=23 // pred_fallthru
          _
        // Predicated region
        $region49: #{encoder_forward.1} parent=23 // pred_check
          %p581 = pneg %p260
        $region50: #{encoder_forward.1} parent=23 // pred_check_branch
          %583 = sbr.rel (%p581) target = $region52
        $region51: #{encoder_forward.1} parent=23 // pred_region
          %p584 = scmp.lt.s32.totalorder %s38, 1
          %s585 = scalar_select %p584, %s38, 1
          %s586 = scalar_lea.vmem %s8, %s585
        $region52: #{encoder_forward.1} parent=23 // pred_fallthru
          _
        // Predicated region
        $region53: #{encoder_forward.1} parent=23 // pred_check
          %p587 = pneg %p286
        $region54: #{encoder_forward.1} parent=23 // pred_check_branch
          %589 = sbr.rel (%p587) target = $region56
        $region55: #{encoder_forward.1} parent=23 // pred_region
          %p590 = scmp.lt.s32.totalorder %s38, 1
          %s591 = scalar_select %p590, %s38, 1
          %s592 = scalar_lea.vmem %s9, %s591
        $region56: #{encoder_forward.1} parent=23 // pred_fallthru
          _
        // Predicated region
        $region57: #{encoder_forward.1} parent=23 // pred_check
          %p593 = pneg %p312
        $region58: #{encoder_forward.1} parent=23 // pred_check_branch
          %595 = sbr.rel (%p593) target = $region60
        $region59: #{encoder_forward.1} parent=23 // pred_region
          %p596 = scmp.lt.s32.totalorder %s38, 1
          %s597 = scalar_select %p596, %s38, 1
          %s598 = smul.addr %s597, 4
          %s599 = smul.addr %s598, 8
          %s600 = scalar_lea.vmem %s10, %s599
        $region60: #{encoder_forward.1} parent=23 // pred_fallthru
          _
        // Predicated region
        $region61: #{encoder_forward.1} parent=23 // pred_check
          %p601 = pneg %p338
        $region62: #{encoder_forward.1} parent=23 // pred_check_branch
          %603 = sbr.rel (%p601) target = $region64
        $region63: #{encoder_forward.1} parent=23 // pred_region
          %s604 = sand.u32 %s328, 1
          %s605 = scalar_lea.sflag [#allocation6], %s604
          %s606 = sand.u32 %s328, 1
          %s607 = scalar_lea.vmem [#allocation5], %s606
          %s609 = ssub.s32 16, 16
          %610 = vsyncadd %s605, %s609
          %s611 = smul.addr %s38, 16
          %s612 = scalar_lea.hbm %s11, %s611
          %s614 = sshll.u32 %s607, 4
          %s615 = int_to_ptr.vmem [resolvable:$true] %s614
          %617 = dma.hbm_to_vmem [thread:$0]  %s612, 16, %s615, %s605
        $region64: #{encoder_forward.1} parent=23 // pred_fallthru
          _
        // Predicated region
        $region65: #{encoder_forward.1} parent=23 // pred_check
          %p618 = pneg %p364
        $region66: #{encoder_forward.1} parent=23 // pred_check_branch
          %620 = sbr.rel (%p618) target = $region68
        $region67: #{encoder_forward.1} parent=23 // pred_region
          %p621 = scmp.lt.s32.totalorder %s38, 1
          %s622 = scalar_select %p621, %s38, 1
          %s623 = smul.addr %s622, 8
          %s624 = smul.addr %s623, 8
          %s625 = scalar_lea.vmem %s12, %s624
        $region68: #{encoder_forward.1} parent=23 // pred_fallthru
          _
        // Predicated region
        $region69: #{encoder_forward.1} parent=23 // pred_check
          %p626 = pneg %p390
        $region70: #{encoder_forward.1} parent=23 // pred_check_branch
          %628 = sbr.rel (%p626) target = $region72
        $region71: #{encoder_forward.1} parent=23 // pred_region
          %p629 = scmp.lt.s32.totalorder %s38, 1
          %s630 = scalar_select %p629, %s38, 1
          %s631 = scalar_lea.vmem %s13, %s630
        $region72: #{encoder_forward.1} parent=23 // pred_fallthru
          _
        // Predicated region
        $region73: #{encoder_forward.1} parent=23 // pred_check
          %p632 = pneg %p416
        $region74: #{encoder_forward.1} parent=23 // pred_check_branch
          %634 = sbr.rel (%p632) target = $region76
        $region75: #{encoder_forward.1} parent=23 // pred_region
          %p635 = scmp.lt.s32.totalorder %s38, 1
          %s636 = scalar_select %p635, %s38, 1
          %s637 = scalar_lea.vmem %s14, %s636
        $region76: #{encoder_forward.1} parent=23 // pred_fallthru
          _
        // Predicated region
        $region77: #{encoder_forward.1} parent=23 // pred_check
          %p638 = pneg %p442
        $region78: #{encoder_forward.1} parent=23 // pred_check_branch
          %640 = sbr.rel (%p638) target = $region80
        $region79: #{encoder_forward.1} parent=23 // pred_region
          %p641 = scmp.lt.s32.totalorder %s38, 1
          %s642 = scalar_select %p641, %s38, 1
          %s643 = scalar_lea.vmem %s15, %s642
        $region80: #{encoder_forward.1} parent=23 // pred_fallthru
          _
      $region24: #{encoder_forward.1} parent=5 // pred_fallthru
        _
      %p644 = scmp.le.s32.totalorder 1, %s30
      %p645 = scmp.lt.s32.totalorder %s30, 5
      %p646 = pnand %p644, %p645
      %p647 = pneg %p646
      // Predicated region
      $region81: #{encoder_forward.1} parent=5 // pred_check
        _
      $region82: #{encoder_forward.1} parent=5 // pred_check_branch
        %649 = sbr.rel (%p646) target = $region84
      $region83: #{encoder_forward.1} parent=5 // pred_region
        %s650 = ssub.s32 %s30, 1
        %s651 = sand.u32 %s55, 1
        %s652 = scalar_lea.sflag [#allocation4], %s651
        %s653 = sand.u32 %s55, 1
        %s654 = smul.addr %s653, 8
        %s655 = scalar_lea.vmem [#allocation3], %s654
        // Predicated region
        $region85: #{encoder_forward.1} parent=83 // pred_check
          %p656 = pneg %p68
        $region86: #{encoder_forward.1} parent=83 // pred_check_branch
          %658 = sbr.rel (%p656) target = $region88
        $region87: #{encoder_forward.1} parent=83 // pred_region
          %659 = dma.done %s652, 128
        $region88: #{encoder_forward.1} parent=83 // pred_fallthru
          _
        %s660 = sand.u32 %s331, 1
        %s661 = scalar_lea.sflag [#allocation6], %s660
        %s662 = sand.u32 %s331, 1
        %s663 = scalar_lea.vmem [#allocation5], %s662
        // Predicated region
        $region89: #{encoder_forward.1} parent=83 // pred_check
          %p664 = pneg %p344
        $region90: #{encoder_forward.1} parent=83 // pred_check_branch
          %666 = sbr.rel (%p664) target = $region92
        $region91: #{encoder_forward.1} parent=83 // pred_region
          %667 = dma.done %s661, 16
        $region92: #{encoder_forward.1} parent=83 // pred_fallthru
          _
        %s668 = sand.u32 %s55, 1
        %s669 = scalar_lea.sflag [#allocation4], %s668
        %s670 = sand.u32 %s55, 1
        %s671 = smul.addr %s670, 8
        %s672 = scalar_lea.vmem [#allocation3], %s671
        %p673 = pneg %p68
        %p674 = pneg %p65
        %p675 = scmp.lt.s32.totalorder %s39, 1
        %s676 = scalar_select %p675, %s39, 1
        %s677 = scalar_lea.vmem %s1, %s676
        %p678 = pneg %p94
        %p679 = pneg %p91
        %p680 = pneg %p115
        %p681 = pneg %p112
        %p682 = pneg %p136
        %p683 = pneg %p133
        %p684 = scmp.lt.s32.totalorder %s40, 1
        %s685 = scalar_select %p684, %s40, 1
        %s686 = smul.addr %s685, 4
        %s687 = smul.addr %s686, 8
        %s688 = scalar_lea.vmem %s4, %s687
        %p689 = pneg %p162
        %p690 = pneg %p159
        %p691 = scmp.lt.s32.totalorder %s40, 1
        %s692 = scalar_select %p691, %s40, 1
        %s693 = scalar_lea.vmem %s5, %s692
        %p694 = pneg %p188
        %p695 = pneg %p185
        %p696 = scmp.lt.s32.totalorder %s40, 1
        %s697 = scalar_select %p696, %s40, 1
        %s698 = smul.addr %s697, 4
        %s699 = smul.addr %s698, 8
        %s700 = scalar_lea.vmem %s6, %s699
        %p701 = pneg %p214
        %p702 = pneg %p211
        %p703 = scmp.lt.s32.totalorder %s40, 1
        %s704 = scalar_select %p703, %s40, 1
        %s705 = scalar_lea.vmem %s7, %s704
        %p706 = pneg %p240
        %p707 = pneg %p237
        %p708 = scmp.lt.s32.totalorder %s40, 1
        %s709 = scalar_select %p708, %s40, 1
        %s710 = scalar_lea.vmem %s8, %s709
        %p711 = pneg %p266
        %p712 = pneg %p263
        %p713 = scmp.lt.s32.totalorder %s40, 1
        %s714 = scalar_select %p713, %s40, 1
        %s715 = scalar_lea.vmem %s9, %s714
        %p716 = pneg %p292
        %p717 = pneg %p289
        %p718 = scmp.lt.s32.totalorder %s40, 1
        %s719 = scalar_select %p718, %s40, 1
        %s720 = smul.addr %s719, 4
        %s721 = smul.addr %s720, 8
        %s722 = scalar_lea.vmem %s10, %s721
        %p723 = pneg %p318
        %p724 = pneg %p315
        %s725 = sand.u32 %s331, 1
        %s726 = scalar_lea.sflag [#allocation6], %s725
        %s727 = sand.u32 %s331, 1
        %s728 = scalar_lea.vmem [#allocation5], %s727
        %p729 = pneg %p344
        %p730 = pneg %p341
        %p731 = scmp.lt.s32.totalorder %s40, 1
        %s732 = scalar_select %p731, %s40, 1
        %s733 = smul.addr %s732, 8
        %s734 = smul.addr %s733, 8
        %s735 = scalar_lea.vmem %s12, %s734
        %p736 = pneg %p370
        %p737 = pneg %p367
        %p738 = scmp.lt.s32.totalorder %s40, 1
        %s739 = scalar_select %p738, %s40, 1
        %s740 = scalar_lea.vmem %s13, %s739
        %p741 = pneg %p396
        %p742 = pneg %p393
        %p743 = scmp.lt.s32.totalorder %s40, 1
        %s744 = scalar_select %p743, %s40, 1
        %s745 = scalar_lea.vmem %s14, %s744
        %p746 = pneg %p422
        %p747 = pneg %p419
        %p748 = scmp.lt.s32.totalorder %s40, 1
        %s749 = scalar_select %p748, %s40, 1
        %s750 = scalar_lea.vmem %s15, %s749
        %p751 = pneg %p448
        %p752 = pneg %p445
        %p753 = pneg %p476
        %p754 = pneg %p473
        %p755 = scmp.lt.s32.totalorder %s40, 1
        %s756 = scalar_select %p755, %s40, 1
        %p757 = scmp.lt.s32.totalorder %s39, 1
        %s758 = scalar_select %p757, %s39, 1
        %s759 = smul.addr %s758, 4
        %s760 = smul.addr %s756, 8
        %s761 = sadd.s32 %s759, %s760
        %s762 = smul.addr %s761, 8
        %s763 = scalar_lea.vmem %s16, %s762
        %p764 = pneg %p504
        %p765 = pneg %p501
        %p766 = scmp.lt.s32.totalorder %s40, 1
        %s767 = scalar_select %p766, %s40, 1
        %p768 = scmp.lt.s32.totalorder %s39, 1
        %s769 = scalar_select %p768, %s39, 1
        %s770 = smul.addr %s767, 2
        %s771 = sadd.s32 %s769, %s770
        %s772 = smul.addr %s771, 8
        %s773 = scalar_lea.vmem %s17, %s772
        %p774 = scmp.lt.s32.totalorder %s39, 1
        %s775 = scalar_select %p774, %s39, 1
        %s776 = scalar_lea.vmem %s1, %s775
        %p777 = scmp.lt.s32.totalorder %s40, 1
        %s778 = scalar_select %p777, %s40, 1
        %s779 = smul.addr %s778, 4
        %s780 = smul.addr %s779, 8
        %s781 = scalar_lea.vmem %s4, %s780
        %p782 = scmp.lt.s32.totalorder %s40, 1
        %s783 = scalar_select %p782, %s40, 1
        %s784 = scalar_lea.vmem %s5, %s783
        %p785 = scmp.lt.s32.totalorder %s40, 1
        %s786 = scalar_select %p785, %s40, 1
        %s787 = smul.addr %s786, 4
        %s788 = smul.addr %s787, 8
        %s789 = scalar_lea.vmem %s6, %s788
        %p790 = scmp.lt.s32.totalorder %s40, 1
        %s791 = scalar_select %p790, %s40, 1
        %s792 = scalar_lea.vmem %s7, %s791
        %p793 = scmp.lt.s32.totalorder %s40, 1
        %s794 = scalar_select %p793, %s40, 1
        %s795 = scalar_lea.vmem %s8, %s794
        %p796 = scmp.lt.s32.totalorder %s40, 1
        %s797 = scalar_select %p796, %s40, 1
        %s798 = scalar_lea.vmem %s9, %s797
        %p799 = scmp.lt.s32.totalorder %s40, 1
        %s800 = scalar_select %p799, %s40, 1
        %s801 = smul.addr %s800, 4
        %s802 = smul.addr %s801, 8
        %s803 = scalar_lea.vmem %s10, %s802
        %p804 = scmp.lt.s32.totalorder %s40, 1
        %s805 = scalar_select %p804, %s40, 1
        %s806 = smul.addr %s805, 8
        %s807 = smul.addr %s806, 8
        %s808 = scalar_lea.vmem %s12, %s807
        %p809 = scmp.lt.s32.totalorder %s40, 1
        %s810 = scalar_select %p809, %s40, 1
        %s811 = scalar_lea.vmem %s13, %s810
        %p812 = scmp.lt.s32.totalorder %s40, 1
        %s813 = scalar_select %p812, %s40, 1
        %s814 = scalar_lea.vmem %s14, %s813
        %p815 = scmp.lt.s32.totalorder %s40, 1
        %s816 = scalar_select %p815, %s40, 1
        %s817 = scalar_lea.vmem %s15, %s816
        %p818 = scmp.lt.s32.totalorder %s40, 1
        %s819 = scalar_select %p818, %s40, 1
        %p820 = scmp.lt.s32.totalorder %s39, 1
        %s821 = scalar_select %p820, %s39, 1
        %s822 = smul.addr %s821, 4
        %s823 = smul.addr %s819, 8
        %s824 = sadd.s32 %s822, %s823
        %s825 = smul.addr %s824, 8
        %s826 = scalar_lea.vmem %s16, %s825
        %p827 = scmp.lt.s32.totalorder %s40, 1
        %s828 = scalar_select %p827, %s40, 1
        %p829 = scmp.lt.s32.totalorder %s39, 1
        %s830 = scalar_select %p829, %s39, 1
        %s831 = smul.addr %s828, 2
        %s832 = sadd.s32 %s830, %s831
        %s833 = smul.addr %s832, 8
        %s834 = scalar_lea.vmem %s17, %s833
        %p836 = scmp.eq.s32.totalorder %s40, 0
        // Predicated region
        $region93: #{encoder_forward.1} parent=83 // pred_check
          %p837 = pneg %p836
        $region94: #{encoder_forward.1} parent=83 // pred_check_branch
          %839 = sbr.rel (%p837) target = $region96
        $region95: #{encoder_forward.1} parent=83 // pred_region
          %v840 = vld [vmem:[%s655] sm:$0xff]
          %v841 = vld [vmem:[%s2] sm:$0x1]
          %v842 = vld [vmem:[%s3] sm:$0x1]
          %vm843 = vcmask 261120
          %v844 = vsel %vm843, %v840, 0.0
          %845 = vadd.xlane.f32.xlu0 %v844
          %v846 = vpop.xlane.xlu0 %845
          %v847 = vrcp.pop 32.0
          %v848 = vmul.f32 %v846, %v847
          %v849 = vsub.f32 %v840, %v848
          %v850 = vmul.f32 %v849, %v849
          %v851 = vsel %vm843, %v850, 0.0
          %852 = vadd.xlane.f32.xlu0 %v851
          %v853 = vpop.xlane.xlu0 %852
          %v854 = vmul.f32 %v853, %v847
          %v855 = vadd.f32 %v854, 1e-12
          %v856 = vrsqrt.pop %v855
          %v857 = vmul.f32 %v849, %v856
          %v859 = vlaneseq
          %v860 = vshrl.u32 %v859, 7
          %v861 = vsub.s32 0, %v860
          %v862 = vrot.slane %v841, %v861
          %v864 = vmul.f32 %v857, %v862
          %v866 = vlaneseq
          %v867 = vshrl.u32 %v866, 7
          %v868 = vsub.s32 0, %v867
          %v869 = vrot.slane %v842, %v868
          %v871 = vadd.f32 %v864, %v869
          %872 = vst.msk [vmem:[#allocation2] sm:$0xff] %vm843, %v871
        $region96: #{encoder_forward.1} parent=83 // pred_fallthru
          _
        %v873 = vld [vmem:[#allocation2] sm:$0xff]
        %v874 = vld [vmem:[%s776] sm:$0x1]
        %v875 = vld [vmem:[%s781] sm:$0xff]
        %v876 = vld [vmem:[%s781 + $0x8] sm:$0xff]
        %v877 = vld [vmem:[%s781 + $0x10] sm:$0xff]
        %v878 = vld [vmem:[%s781 + $0x18] sm:$0xff]
        %v879 = vpack.c.bf16 %v873, %v873
        %v880 = vpack.c.bf16 %v876, %v875
        %v881 = vpack.c.bf16 %v878, %v877
        %v882 = vld [vmem:[%s784] sm:$0x1]
        %v884 = vlaneseq
        %v885 = vshrl.u32 %v884, 7
        %v886 = vsub.s32 0, %v885
        %v887 = vrot.slane %v882, %v886
        %vm889 = vcmask 261120
        %v891 = vsel %vm889, %v879, 0
        %893 = vmatprep.subr.bf16.mxu0 0
        %894 = vmatpush1.bf16.msra.mxu0 %v880
        %895 = vmatprep.subr.bf16.mxu0 0
        %896 = vmatpush1.bf16.msra.mxu0 %v881
        %897 = vmatprep.subr.bf16.mxu0 0
        %898 = vmatpush1.bf16.msra.mxu0 0
        %899 = vmatprep.subr.bf16.mxu0 0
        %900 = vmatpush1.bf16.msra.mxu0 0
        %901 = vmatprep.subr.bf16.mxu0 0
        %902 = vmatpush1.bf16.msra.mxu0 0
        %903 = vmatprep.subr.bf16.mxu0 0
        %904 = vmatpush1.bf16.msra.mxu0 0
        %905 = vmatprep.subr.bf16.mxu0 0
        %906 = vmatpush1.bf16.msra.mxu0 0
        %907 = vmatprep.subr.bf16.mxu0 0
        %908 = vmatpush1.bf16.msra.mxu0 0
        %909 = vmatprep.subr.bf16.mxu0 0
        %910 = vmatpush1.bf16.msra.mxu0 0
        %911 = vmatprep.subr.bf16.mxu0 0
        %912 = vmatpush1.bf16.msra.mxu0 0
        %913 = vmatprep.subr.bf16.mxu0 0
        %914 = vmatpush1.bf16.msra.mxu0 0
        %915 = vmatprep.subr.bf16.mxu0 0
        %916 = vmatpush1.bf16.msra.mxu0 0
        %917 = vmatprep.subr.bf16.mxu0 0
        %918 = vmatpush1.bf16.msra.mxu0 0
        %919 = vmatprep.subr.bf16.mxu0 0
        %920 = vmatpush1.bf16.msra.mxu0 0
        %921 = vmatprep.subr.bf16.mxu0 0
        %922 = vmatpush1.bf16.msra.mxu0 0
        %923 = vmatprep.subr.bf16.mxu0 0
        %924 = vmatpush1.bf16.msra.mxu0 0
        %925 = vmatprep.mubr.bf16.mxu0 0
        %926 = vmatmul.mubr.bf16.gmra.mrb[0].mxu0 %v891
        %v927 = vpop.f32.mrb[0].mxu0
        %v928 = vadd.f32 %v887, %v927
        %v929 = vpop.f32.mrb[0].mxu0
        %v930 = vpop.f32.mrb[0].mxu0
        %v931 = vpop.f32.mrb[0].mxu0
        %932 = vdwg.mxu0
        %934 = vrot.lane.b32.xlu0 %v928, 96
        %v935 = vpop.permute.xlu0 %934
        %937 = vxpose.xlu0.b32.start [1/16] %v935, 128
        %938 = vxpose.xlu0.b32.cont [2/16] 0.0, 128
        %939 = vxpose.xlu0.b32.cont [3/16] 0.0, 128
        %940 = vxpose.xlu0.b32.cont [4/16] 0.0, 128
        %941 = vxpose.xlu0.b32.cont [5/16] 0.0, 128
        %942 = vxpose.xlu0.b32.cont [6/16] 0.0, 128
        %943 = vxpose.xlu0.b32.cont [7/16] 0.0, 128
        %944 = vxpose.xlu0.b32.cont [8/16] 0.0, 128
        %945 = vxpose.xlu0.b32.cont [9/16] 0.0, 128
        %946 = vxpose.xlu0.b32.cont [10/16] 0.0, 128
        %947 = vxpose.xlu0.b32.cont [11/16] 0.0, 128
        %948 = vxpose.xlu0.b32.cont [12/16] 0.0, 128
        %949 = vxpose.xlu0.b32.cont [13/16] 0.0, 128
        %950 = vxpose.xlu0.b32.cont [14/16] 0.0, 128
        %951 = vxpose.xlu0.b32.cont [15/16] 0.0, 128
        %952 = vxpose.xlu0.b32.end [16/16] 0.0, 128
        %v953 = vpop.trf.xlu0
        %v954 = vpop.trf.xlu0
        %v955 = vpop.trf.xlu0
        %v956 = vpop.trf.xlu0
        %v957 = vpop.trf.xlu0
        %v958 = vpop.trf.xlu0
        %v959 = vpop.trf.xlu0
        %v960 = vpop.trf.xlu0
        %v961 = vpop.trf.xlu0
        %v962 = vpop.trf.xlu0
        %v963 = vpop.trf.xlu0
        %v964 = vpop.trf.xlu0
        %v965 = vpop.trf.xlu0
        %v966 = vpop.trf.xlu0
        %v967 = vpop.trf.xlu0
        %v968 = vpop.trf.xlu0
        %v969 = vpack.c.bf16 %v928, %v928
        %v970 = vpack.c.bf16 %v953, %v953
        %vm971 = vcmask 64512
        %v973 = vsel %vm971, %v969, 0
        %vm975 = vcmask 1043456
        %v977 = vsel %vm975, %v970, 0
        %979 = vmatprep.subr.bf16.mxu0 0
        %980 = vmatpush1.bf16.msra.mxu0 %v977
        %981 = vmatprep.subr.bf16.mxu0 0
        %982 = vmatpush1.bf16.msra.mxu0 0
        %983 = vmatprep.subr.bf16.mxu0 0
        %984 = vmatpush1.bf16.msra.mxu0 0
        %985 = vmatprep.subr.bf16.mxu0 0
        %986 = vmatpush1.bf16.msra.mxu0 0
        %987 = vmatprep.subr.bf16.mxu0 0
        %988 = vmatpush1.bf16.msra.mxu0 0
        %989 = vmatprep.subr.bf16.mxu0 0
        %990 = vmatpush1.bf16.msra.mxu0 0
        %991 = vmatprep.subr.bf16.mxu0 0
        %992 = vmatpush1.bf16.msra.mxu0 0
        %993 = vmatprep.subr.bf16.mxu0 0
        %994 = vmatpush1.bf16.msra.mxu0 0
        %995 = vmatprep.subr.bf16.mxu0 0
        %996 = vmatpush1.bf16.msra.mxu0 0
        %997 = vmatprep.subr.bf16.mxu0 0
        %998 = vmatpush1.bf16.msra.mxu0 0
        %999 = vmatprep.subr.bf16.mxu0 0
        %1000 = vmatpush1.bf16.msra.mxu0 0
        %1001 = vmatprep.subr.bf16.mxu0 0
        %1002 = vmatpush1.bf16.msra.mxu0 0
        %1003 = vmatprep.subr.bf16.mxu0 0
        %1004 = vmatpush1.bf16.msra.mxu0 0
        %1005 = vmatprep.subr.bf16.mxu0 0
        %1006 = vmatpush1.bf16.msra.mxu0 0
        %1007 = vmatprep.subr.bf16.mxu0 0
        %1008 = vmatpush1.bf16.msra.mxu0 0
        %1009 = vmatprep.subr.bf16.mxu0 0
        %1010 = vmatpush1.bf16.msra.mxu0 0
        %1011 = vmatprep.mubr.bf16.mxu0 0
        %1012 = vmatmul.mubr.bf16.gmra.mrb[0].mxu0 %v973
        %v1013 = vpop.f32.mrb[0].mxu0
        %v1014 = vadd.f32 0.0, %v1013
        %v1015 = vpop.f32.mrb[0].mxu0
        %v1016 = vpop.f32.mrb[0].mxu0
        %v1017 = vpop.f32.mrb[0].mxu0
        %1018 = vdwg.mxu0
        %v1019 = vmul.f32 %v1014, 0.35355338
        %v1021 = vlaneseq
        %v1022 = vshrl.u32 %v1021, 7
        %v1023 = vsub.s32 0, %v1022
        %v1024 = vrot.slane %v874, %v1023
        %v1026 = vadd.f32 %v1019, %v1024
        %v1027 = vsel %vm971, %v1026, -inf
        %1028 = vmax.xlane.f32.xlu0 %v1027
        %v1029 = vpop.xlane.xlu0 %1028
        %v1030 = vsub.f32 %v1026, %v1029
        %v1031 = vmul.f32 %v1030, 1.442695
        %v1032 = vpow.pop %v1031
        %v1033 = vsel %vm971, %v1032, 0.0
        %1034 = vadd.xlane.f32.xlu0 %v1033
        %v1035 = vpop.xlane.xlu0 %1034
        %v1036 = vrcp.pop %v1035
        %v1037 = vmul.f32 %v1032, %v1036
        %1038 = vst.msk [vmem:[%s826] sm:$0xff] %vm971, %v1037
        %v1039 = vpack.c.bf16 %v1037, %v1037
        %1041 = vrot.lane.b32.xlu0 %v969, 64
        %v1042 = vpop.permute.xlu0 %1041
        %v1044 = vsel %vm971, %v1039, 0
        %v1047 = vsel %vm975, %v1042, 0
        %1049 = vmatprep.subr.bf16.mxu0 0
        %1050 = vmatpush1.bf16.msra.mxu0 %v1047
        %1051 = vmatprep.subr.bf16.mxu0 0
        %1052 = vmatpush1.bf16.msra.mxu0 0
        %1053 = vmatprep.subr.bf16.mxu0 0
        %1054 = vmatpush1.bf16.msra.mxu0 0
        %1055 = vmatprep.subr.bf16.mxu0 0
        %1056 = vmatpush1.bf16.msra.mxu0 0
        %1057 = vmatprep.subr.bf16.mxu0 0
        %1058 = vmatpush1.bf16.msra.mxu0 0
        %1059 = vmatprep.subr.bf16.mxu0 0
        %1060 = vmatpush1.bf16.msra.mxu0 0
        %1061 = vmatprep.subr.bf16.mxu0 0
        %1062 = vmatpush1.bf16.msra.mxu0 0
        %1063 = vmatprep.subr.bf16.mxu0 0
        %1064 = vmatpush1.bf16.msra.mxu0 0
        %1065 = vmatprep.subr.bf16.mxu0 0
        %1066 = vmatpush1.bf16.msra.mxu0 0
        %1067 = vmatprep.subr.bf16.mxu0 0
        %1068 = vmatpush1.bf16.msra.mxu0 0
        %1069 = vmatprep.subr.bf16.mxu0 0
        %1070 = vmatpush1.bf16.msra.mxu0 0
        %1071 = vmatprep.subr.bf16.mxu0 0
        %1072 = vmatpush1.bf16.msra.mxu0 0
        %1073 = vmatprep.subr.bf16.mxu0 0
        %1074 = vmatpush1.bf16.msra.mxu0 0
        %1075 = vmatprep.subr.bf16.mxu0 0
        %1076 = vmatpush1.bf16.msra.mxu0 0
        %1077 = vmatprep.subr.bf16.mxu0 0
        %1078 = vmatpush1.bf16.msra.mxu0 0
        %1079 = vmatprep.subr.bf16.mxu0 0
        %1080 = vmatpush1.bf16.msra.mxu0 0
        %1081 = vmatprep.mubr.bf16.mxu0 0
        %1082 = vmatmul.mubr.bf16.gmra.mrb[0].mxu0 %v1044
        %v1083 = vpop.f32.mrb[0].mxu0
        %v1084 = vadd.f32 0.0, %v1083
        %v1085 = vpop.f32.mrb[0].mxu0
        %v1086 = vpop.f32.mrb[0].mxu0
        %v1087 = vpop.f32.mrb[0].mxu0
        %1088 = vdwg.mxu0
        %1089 = vrot.lane.b32.xlu0 %v928, 88
        %v1090 = vpop.permute.xlu0 %1089
        %1092 = vxpose.xlu0.b32.start [1/16] %v1090, 128
        %1093 = vxpose.xlu0.b32.cont [2/16] 0.0, 128
        %1094 = vxpose.xlu0.b32.cont [3/16] 0.0, 128
        %1095 = vxpose.xlu0.b32.cont [4/16] 0.0, 128
        %1096 = vxpose.xlu0.b32.cont [5/16] 0.0, 128
        %1097 = vxpose.xlu0.b32.cont [6/16] 0.0, 128
        %1098 = vxpose.xlu0.b32.cont [7/16] 0.0, 128
        %1099 = vxpose.xlu0.b32.cont [8/16] 0.0, 128
        %1100 = vxpose.xlu0.b32.cont [9/16] 0.0, 128
        %1101 = vxpose.xlu0.b32.cont [10/16] 0.0, 128
        %1102 = vxpose.xlu0.b32.cont [11/16] 0.0, 128
        %1103 = vxpose.xlu0.b32.cont [12/16] 0.0, 128
        %1104 = vxpose.xlu0.b32.cont [13/16] 0.0, 128
        %1105 = vxpose.xlu0.b32.cont [14/16] 0.0, 128
        %1106 = vxpose.xlu0.b32.cont [15/16] 0.0, 128
        %1107 = vxpose.xlu0.b32.end [16/16] 0.0, 128
        %v1108 = vpop.trf.xlu0
        %v1109 = vpop.trf.xlu0
        %v1110 = vpop.trf.xlu0
        %v1111 = vpop.trf.xlu0
        %v1112 = vpop.trf.xlu0
        %v1113 = vpop.trf.xlu0
        %v1114 = vpop.trf.xlu0
        %v1115 = vpop.trf.xlu0
        %v1116 = vpop.trf.xlu0
        %v1117 = vpop.trf.xlu0
        %v1118 = vpop.trf.xlu0
        %v1119 = vpop.trf.xlu0
        %v1120 = vpop.trf.xlu0
        %v1121 = vpop.trf.xlu0
        %v1122 = vpop.trf.xlu0
        %v1123 = vpop.trf.xlu0
        %v1124 = vpack.c.bf16 %v1108, %v1108
        %1125 = vrot.lane.b32.xlu0 %v969, 120
        %v1126 = vpop.permute.xlu0 %1125
        %v1128 = vsel %vm971, %v1126, 0
        %v1131 = vsel %vm975, %v1124, 0
        %1133 = vmatprep.subr.bf16.mxu0 0
        %1134 = vmatpush1.bf16.msra.mxu0 %v1131
        %1135 = vmatprep.subr.bf16.mxu0 0
        %1136 = vmatpush1.bf16.msra.mxu0 0
        %1137 = vmatprep.subr.bf16.mxu0 0
        %1138 = vmatpush1.bf16.msra.mxu0 0
        %1139 = vmatprep.subr.bf16.mxu0 0
        %1140 = vmatpush1.bf16.msra.mxu0 0
        %1141 = vmatprep.subr.bf16.mxu0 0
        %1142 = vmatpush1.bf16.msra.mxu0 0
        %1143 = vmatprep.subr.bf16.mxu0 0
        %1144 = vmatpush1.bf16.msra.mxu0 0
        %1145 = vmatprep.subr.bf16.mxu0 0
        %1146 = vmatpush1.bf16.msra.mxu0 0
        %1147 = vmatprep.subr.bf16.mxu0 0
        %1148 = vmatpush1.bf16.msra.mxu0 0
        %1149 = vmatprep.subr.bf16.mxu0 0
        %1150 = vmatpush1.bf16.msra.mxu0 0
        %1151 = vmatprep.subr.bf16.mxu0 0
        %1152 = vmatpush1.bf16.msra.mxu0 0
        %1153 = vmatprep.subr.bf16.mxu0 0
        %1154 = vmatpush1.bf16.msra.mxu0 0
        %1155 = vmatprep.subr.bf16.mxu0 0
        %1156 = vmatpush1.bf16.msra.mxu0 0
        %1157 = vmatprep.subr.bf16.mxu0 0
        %1158 = vmatpush1.bf16.msra.mxu0 0
        %1159 = vmatprep.subr.bf16.mxu0 0
        %1160 = vmatpush1.bf16.msra.mxu0 0
        %1161 = vmatprep.subr.bf16.mxu0 0
        %1162 = vmatpush1.bf16.msra.mxu0 0
        %1163 = vmatprep.subr.bf16.mxu0 0
        %1164 = vmatpush1.bf16.msra.mxu0 0
        %1165 = vmatprep.mubr.bf16.mxu0 0
        %1166 = vmatmul.mubr.bf16.gmra.mrb[0].mxu0 %v1128
        %v1167 = vpop.f32.mrb[0].mxu0
        %v1168 = vadd.f32 0.0, %v1167
        %v1169 = vpop.f32.mrb[0].mxu0
        %v1170 = vpop.f32.mrb[0].mxu0
        %v1171 = vpop.f32.mrb[0].mxu0
        %1172 = vdwg.mxu0
        %v1173 = vmul.f32 %v1168, 0.35355338
        %v1174 = vadd.f32 %v1173, %v1024
        %v1175 = vsel %vm971, %v1174, -inf
        %1176 = vmax.xlane.f32.xlu0 %v1175
        %v1177 = vpop.xlane.xlu0 %1176
        %v1178 = vsub.f32 %v1174, %v1177
        %v1179 = vmul.f32 %v1178, 1.442695
        %v1180 = vpow.pop %v1179
        %v1181 = vsel %vm971, %v1180, 0.0
        %1182 = vadd.xlane.f32.xlu0 %v1181
        %v1183 = vpop.xlane.xlu0 %1182
        %v1184 = vrcp.pop %v1183
        %v1185 = vmul.f32 %v1180, %v1184
        %s1186 = scalar_lea.vmem %s826, 8
        %1187 = vst.msk [vmem:[%s1186] sm:$0xff] %vm971, %v1185
        %v1188 = vpack.c.bf16 %v1185, %v1185
        %1189 = vrot.lane.b32.xlu0 %v969, 56
        %v1190 = vpop.permute.xlu0 %1189
        %v1192 = vsel %vm971, %v1188, 0
        %v1195 = vsel %vm975, %v1190, 0
        %1197 = vmatprep.subr.bf16.mxu0 0
        %1198 = vmatpush1.bf16.msra.mxu0 %v1195
        %1199 = vmatprep.subr.bf16.mxu0 0
        %1200 = vmatpush1.bf16.msra.mxu0 0
        %1201 = vmatprep.subr.bf16.mxu0 0
        %1202 = vmatpush1.bf16.msra.mxu0 0
        %1203 = vmatprep.subr.bf16.mxu0 0
        %1204 = vmatpush1.bf16.msra.mxu0 0
        %1205 = vmatprep.subr.bf16.mxu0 0
        %1206 = vmatpush1.bf16.msra.mxu0 0
        %1207 = vmatprep.subr.bf16.mxu0 0
        %1208 = vmatpush1.bf16.msra.mxu0 0
        %1209 = vmatprep.subr.bf16.mxu0 0
        %1210 = vmatpush1.bf16.msra.mxu0 0
        %1211 = vmatprep.subr.bf16.mxu0 0
        %1212 = vmatpush1.bf16.msra.mxu0 0
        %1213 = vmatprep.subr.bf16.mxu0 0
        %1214 = vmatpush1.bf16.msra.mxu0 0
        %1215 = vmatprep.subr.bf16.mxu0 0
        %1216 = vmatpush1.bf16.msra.mxu0 0
        %1217 = vmatprep.subr.bf16.mxu0 0
        %1218 = vmatpush1.bf16.msra.mxu0 0
        %1219 = vmatprep.subr.bf16.mxu0 0
        %1220 = vmatpush1.bf16.msra.mxu0 0
        %1221 = vmatprep.subr.bf16.mxu0 0
        %1222 = vmatpush1.bf16.msra.mxu0 0
        %1223 = vmatprep.subr.bf16.mxu0 0
        %1224 = vmatpush1.bf16.msra.mxu0 0
        %1225 = vmatprep.subr.bf16.mxu0 0
        %1226 = vmatpush1.bf16.msra.mxu0 0
        %1227 = vmatprep.subr.bf16.mxu0 0
        %1228 = vmatpush1.bf16.msra.mxu0 0
        %1229 = vmatprep.mubr.bf16.mxu0 0
        %1230 = vmatmul.mubr.bf16.gmra.mrb[0].mxu0 %v1192
        %v1231 = vpop.f32.mrb[0].mxu0
        %v1232 = vadd.f32 0.0, %v1231
        %v1233 = vpop.f32.mrb[0].mxu0
        %v1234 = vpop.f32.mrb[0].mxu0
        %v1235 = vpop.f32.mrb[0].mxu0
        %1236 = vdwg.mxu0
        %1237 = vrot.lane.b32.xlu0 %v928, 80
        %v1238 = vpop.permute.xlu0 %1237
        %1240 = vxpose.xlu0.b32.start [1/16] %v1238, 128
        %1241 = vxpose.xlu0.b32.cont [2/16] 0.0, 128
        %1242 = vxpose.xlu0.b32.cont [3/16] 0.0, 128
        %1243 = vxpose.xlu0.b32.cont [4/16] 0.0, 128
        %1244 = vxpose.xlu0.b32.cont [5/16] 0.0, 128
        %1245 = vxpose.xlu0.b32.cont [6/16] 0.0, 128
        %1246 = vxpose.xlu0.b32.cont [7/16] 0.0, 128
        %1247 = vxpose.xlu0.b32.cont [8/16] 0.0, 128
        %1248 = vxpose.xlu0.b32.cont [9/16] 0.0, 128
        %1249 = vxpose.xlu0.b32.cont [10/16] 0.0, 128
        %1250 = vxpose.xlu0.b32.cont [11/16] 0.0, 128
        %1251 = vxpose.xlu0.b32.cont [12/16] 0.0, 128
        %1252 = vxpose.xlu0.b32.cont [13/16] 0.0, 128
        %1253 = vxpose.xlu0.b32.cont [14/16] 0.0, 128
        %1254 = vxpose.xlu0.b32.cont [15/16] 0.0, 128
        %1255 = vxpose.xlu0.b32.end [16/16] 0.0, 128
        %v1256 = vpop.trf.xlu0
        %v1257 = vpop.trf.xlu0
        %v1258 = vpop.trf.xlu0
        %v1259 = vpop.trf.xlu0
        %v1260 = vpop.trf.xlu0
        %v1261 = vpop.trf.xlu0
        %v1262 = vpop.trf.xlu0
        %v1263 = vpop.trf.xlu0
        %v1264 = vpop.trf.xlu0
        %v1265 = vpop.trf.xlu0
        %v1266 = vpop.trf.xlu0
        %v1267 = vpop.trf.xlu0
        %v1268 = vpop.trf.xlu0
        %v1269 = vpop.trf.xlu0
        %v1270 = vpop.trf.xlu0
        %v1271 = vpop.trf.xlu0
        %v1272 = vpack.c.bf16 %v1256, %v1256
        %1273 = vrot.lane.b32.xlu0 %v969, 112
        %v1274 = vpop.permute.xlu0 %1273
        %v1276 = vsel %vm971, %v1274, 0
        %v1279 = vsel %vm975, %v1272, 0
        %1281 = vmatprep.subr.bf16.mxu0 0
        %1282 = vmatpush1.bf16.msra.mxu0 %v1279
        %1283 = vmatprep.subr.bf16.mxu0 0
        %1284 = vmatpush1.bf16.msra.mxu0 0
        %1285 = vmatprep.subr.bf16.mxu0 0
        %1286 = vmatpush1.bf16.msra.mxu0 0
        %1287 = vmatprep.subr.bf16.mxu0 0
        %1288 = vmatpush1.bf16.msra.mxu0 0
        %1289 = vmatprep.subr.bf16.mxu0 0
        %1290 = vmatpush1.bf16.msra.mxu0 0
        %1291 = vmatprep.subr.bf16.mxu0 0
        %1292 = vmatpush1.bf16.msra.mxu0 0
        %1293 = vmatprep.subr.bf16.mxu0 0
        %1294 = vmatpush1.bf16.msra.mxu0 0
        %1295 = vmatprep.subr.bf16.mxu0 0
        %1296 = vmatpush1.bf16.msra.mxu0 0
        %1297 = vmatprep.subr.bf16.mxu0 0
        %1298 = vmatpush1.bf16.msra.mxu0 0
        %1299 = vmatprep.subr.bf16.mxu0 0
        %1300 = vmatpush1.bf16.msra.mxu0 0
        %1301 = vmatprep.subr.bf16.mxu0 0
        %1302 = vmatpush1.bf16.msra.mxu0 0
        %1303 = vmatprep.subr.bf16.mxu0 0
        %1304 = vmatpush1.bf16.msra.mxu0 0
        %1305 = vmatprep.subr.bf16.mxu0 0
        %1306 = vmatpush1.bf16.msra.mxu0 0
        %1307 = vmatprep.subr.bf16.mxu0 0
        %1308 = vmatpush1.bf16.msra.mxu0 0
        %1309 = vmatprep.subr.bf16.mxu0 0
        %1310 = vmatpush1.bf16.msra.mxu0 0
        %1311 = vmatprep.subr.bf16.mxu0 0
        %1312 = vmatpush1.bf16.msra.mxu0 0
        %1313 = vmatprep.mubr.bf16.mxu0 0
        %1314 = vmatmul.mubr.bf16.gmra.mrb[0].mxu0 %v1276
        %v1315 = vpop.f32.mrb[0].mxu0
        %v1316 = vadd.f32 0.0, %v1315
        %v1317 = vpop.f32.mrb[0].mxu0
        %v1318 = vpop.f32.mrb[0].mxu0
        %v1319 = vpop.f32.mrb[0].mxu0
        %1320 = vdwg.mxu0
        %v1321 = vmul.f32 %v1316, 0.35355338
        %v1322 = vadd.f32 %v1321, %v1024
        %v1323 = vsel %vm971, %v1322, -inf
        %1324 = vmax.xlane.f32.xlu0 %v1323
        %v1325 = vpop.xlane.xlu0 %1324
        %v1326 = vsub.f32 %v1322, %v1325
        %v1327 = vmul.f32 %v1326, 1.442695
        %v1328 = vpow.pop %v1327
        %v1329 = vsel %vm971, %v1328, 0.0
        %1330 = vadd.xlane.f32.xlu0 %v1329
        %v1331 = vpop.xlane.xlu0 %1330
        %v1332 = vrcp.pop %v1331
        %v1333 = vmul.f32 %v1328, %v1332
        %s1334 = scalar_lea.vmem %s826, 16
        %1335 = vst.msk [vmem:[%s1334] sm:$0xff] %vm971, %v1333
        %v1336 = vpack.c.bf16 %v1333, %v1333
        %1337 = vrot.lane.b32.xlu0 %v969, 48
        %v1338 = vpop.permute.xlu0 %1337
        %v1340 = vsel %vm971, %v1336, 0
        %v1343 = vsel %vm975, %v1338, 0
        %1345 = vmatprep.subr.bf16.mxu0 0
        %1346 = vmatpush1.bf16.msra.mxu0 %v1343
        %1347 = vmatprep.subr.bf16.mxu0 0
        %1348 = vmatpush1.bf16.msra.mxu0 0
        %1349 = vmatprep.subr.bf16.mxu0 0
        %1350 = vmatpush1.bf16.msra.mxu0 0
        %1351 = vmatprep.subr.bf16.mxu0 0
        %1352 = vmatpush1.bf16.msra.mxu0 0
        %1353 = vmatprep.subr.bf16.mxu0 0
        %1354 = vmatpush1.bf16.msra.mxu0 0
        %1355 = vmatprep.subr.bf16.mxu0 0
        %1356 = vmatpush1.bf16.msra.mxu0 0
        %1357 = vmatprep.subr.bf16.mxu0 0
        %1358 = vmatpush1.bf16.msra.mxu0 0
        %1359 = vmatprep.subr.bf16.mxu0 0
        %1360 = vmatpush1.bf16.msra.mxu0 0
        %1361 = vmatprep.subr.bf16.mxu0 0
        %1362 = vmatpush1.bf16.msra.mxu0 0
        %1363 = vmatprep.subr.bf16.mxu0 0
        %1364 = vmatpush1.bf16.msra.mxu0 0
        %1365 = vmatprep.subr.bf16.mxu0 0
        %1366 = vmatpush1.bf16.msra.mxu0 0
        %1367 = vmatprep.subr.bf16.mxu0 0
        %1368 = vmatpush1.bf16.msra.mxu0 0
        %1369 = vmatprep.subr.bf16.mxu0 0
        %1370 = vmatpush1.bf16.msra.mxu0 0
        %1371 = vmatprep.subr.bf16.mxu0 0
        %1372 = vmatpush1.bf16.msra.mxu0 0
        %1373 = vmatprep.subr.bf16.mxu0 0
        %1374 = vmatpush1.bf16.msra.mxu0 0
        %1375 = vmatprep.subr.bf16.mxu0 0
        %1376 = vmatpush1.bf16.msra.mxu0 0
        %1377 = vmatprep.mubr.bf16.mxu0 0
        %1378 = vmatmul.mubr.bf16.gmra.mrb[0].mxu0 %v1340
        %v1379 = vpop.f32.mrb[0].mxu0
        %v1380 = vadd.f32 0.0, %v1379
        %v1381 = vpop.f32.mrb[0].mxu0
        %v1382 = vpop.f32.mrb[0].mxu0
        %v1383 = vpop.f32.mrb[0].mxu0
        %1384 = vdwg.mxu0
        %1385 = vrot.lane.b32.xlu0 %v928, 72
        %v1386 = vpop.permute.xlu0 %1385
        %1388 = vxpose.xlu0.b32.start [1/16] %v1386, 128
        %1389 = vxpose.xlu0.b32.cont [2/16] 0.0, 128
        %1390 = vxpose.xlu0.b32.cont [3/16] 0.0, 128
        %1391 = vxpose.xlu0.b32.cont [4/16] 0.0, 128
        %1392 = vxpose.xlu0.b32.cont [5/16] 0.0, 128
        %1393 = vxpose.xlu0.b32.cont [6/16] 0.0, 128
        %1394 = vxpose.xlu0.b32.cont [7/16] 0.0, 128
        %1395 = vxpose.xlu0.b32.cont [8/16] 0.0, 128
        %1396 = vxpose.xlu0.b32.cont [9/16] 0.0, 128
        %1397 = vxpose.xlu0.b32.cont [10/16] 0.0, 128
        %1398 = vxpose.xlu0.b32.cont [11/16] 0.0, 128
        %1399 = vxpose.xlu0.b32.cont [12/16] 0.0, 128
        %1400 = vxpose.xlu0.b32.cont [13/16] 0.0, 128
        %1401 = vxpose.xlu0.b32.cont [14/16] 0.0, 128
        %1402 = vxpose.xlu0.b32.cont [15/16] 0.0, 128
        %1403 = vxpose.xlu0.b32.end [16/16] 0.0, 128
        %v1404 = vpop.trf.xlu0
        %v1405 = vpop.trf.xlu0
        %v1406 = vpop.trf.xlu0
        %v1407 = vpop.trf.xlu0
        %v1408 = vpop.trf.xlu0
        %v1409 = vpop.trf.xlu0
        %v1410 = vpop.trf.xlu0
        %v1411 = vpop.trf.xlu0
        %v1412 = vpop.trf.xlu0
        %v1413 = vpop.trf.xlu0
        %v1414 = vpop.trf.xlu0
        %v1415 = vpop.trf.xlu0
        %v1416 = vpop.trf.xlu0
        %v1417 = vpop.trf.xlu0
        %v1418 = vpop.trf.xlu0
        %v1419 = vpop.trf.xlu0
        %v1420 = vpack.c.bf16 %v1404, %v1404
        %1421 = vrot.lane.b32.xlu0 %v969, 104
        %v1422 = vpop.permute.xlu0 %1421
        %v1424 = vsel %vm971, %v1422, 0
        %v1427 = vsel %vm975, %v1420, 0
        %1429 = vmatprep.subr.bf16.mxu0 0
        %1430 = vmatpush1.bf16.msra.mxu0 %v1427
        %1431 = vmatprep.subr.bf16.mxu0 0
        %1432 = vmatpush1.bf16.msra.mxu0 0
        %1433 = vmatprep.subr.bf16.mxu0 0
        %1434 = vmatpush1.bf16.msra.mxu0 0
        %1435 = vmatprep.subr.bf16.mxu0 0
        %1436 = vmatpush1.bf16.msra.mxu0 0
        %1437 = vmatprep.subr.bf16.mxu0 0
        %1438 = vmatpush1.bf16.msra.mxu0 0
        %1439 = vmatprep.subr.bf16.mxu0 0
        %1440 = vmatpush1.bf16.msra.mxu0 0
        %1441 = vmatprep.subr.bf16.mxu0 0
        %1442 = vmatpush1.bf16.msra.mxu0 0
        %1443 = vmatprep.subr.bf16.mxu0 0
        %1444 = vmatpush1.bf16.msra.mxu0 0
        %1445 = vmatprep.subr.bf16.mxu0 0
        %1446 = vmatpush1.bf16.msra.mxu0 0
        %1447 = vmatprep.subr.bf16.mxu0 0
        %1448 = vmatpush1.bf16.msra.mxu0 0
        %1449 = vmatprep.subr.bf16.mxu0 0
        %1450 = vmatpush1.bf16.msra.mxu0 0
        %1451 = vmatprep.subr.bf16.mxu0 0
        %1452 = vmatpush1.bf16.msra.mxu0 0
        %1453 = vmatprep.subr.bf16.mxu0 0
        %1454 = vmatpush1.bf16.msra.mxu0 0
        %1455 = vmatprep.subr.bf16.mxu0 0
        %1456 = vmatpush1.bf16.msra.mxu0 0
        %1457 = vmatprep.subr.bf16.mxu0 0
        %1458 = vmatpush1.bf16.msra.mxu0 0
        %1459 = vmatprep.subr.bf16.mxu0 0
        %1460 = vmatpush1.bf16.msra.mxu0 0
        %1461 = vmatprep.mubr.bf16.mxu0 0
        %1462 = vmatmul.mubr.bf16.gmra.mrb[0].mxu0 %v1424
        %v1463 = vpop.f32.mrb[0].mxu0
        %v1464 = vadd.f32 0.0, %v1463
        %v1465 = vpop.f32.mrb[0].mxu0
        %v1466 = vpop.f32.mrb[0].mxu0
        %v1467 = vpop.f32.mrb[0].mxu0
        %1468 = vdwg.mxu0
        %v1469 = vmul.f32 %v1464, 0.35355338
        %v1470 = vadd.f32 %v1469, %v1024
        %v1471 = vsel %vm971, %v1470, -inf
        %1472 = vmax.xlane.f32.xlu0 %v1471
        %v1473 = vpop.xlane.xlu0 %1472
        %v1474 = vsub.f32 %v1470, %v1473
        %v1475 = vmul.f32 %v1474, 1.442695
        %v1476 = vpow.pop %v1475
        %v1477 = vsel %vm971, %v1476, 0.0
        %1478 = vadd.xlane.f32.xlu0 %v1477
        %v1479 = vpop.xlane.xlu0 %1478
        %v1480 = vrcp.pop %v1479
        %v1481 = vmul.f32 %v1476, %v1480
        %s1482 = scalar_lea.vmem %s826, 24
        %1483 = vst.msk [vmem:[%s1482] sm:$0xff] %vm971, %v1481
        %v1484 = vpack.c.bf16 %v1481, %v1481
        %1485 = vrot.lane.b32.xlu0 %v969, 40
        %v1486 = vpop.permute.xlu0 %1485
        %v1488 = vsel %vm971, %v1484, 0
        %v1491 = vsel %vm975, %v1486, 0
        %1493 = vmatprep.subr.bf16.mxu0 0
        %1494 = vmatpush1.bf16.msra.mxu0 %v1491
        %1495 = vmatprep.subr.bf16.mxu0 0
        %1496 = vmatpush1.bf16.msra.mxu0 0
        %1497 = vmatprep.subr.bf16.mxu0 0
        %1498 = vmatpush1.bf16.msra.mxu0 0
        %1499 = vmatprep.subr.bf16.mxu0 0
        %1500 = vmatpush1.bf16.msra.mxu0 0
        %1501 = vmatprep.subr.bf16.mxu0 0
        %1502 = vmatpush1.bf16.msra.mxu0 0
        %1503 = vmatprep.subr.bf16.mxu0 0
        %1504 = vmatpush1.bf16.msra.mxu0 0
        %1505 = vmatprep.subr.bf16.mxu0 0
        %1506 = vmatpush1.bf16.msra.mxu0 0
        %1507 = vmatprep.subr.bf16.mxu0 0
        %1508 = vmatpush1.bf16.msra.mxu0 0
        %1509 = vmatprep.subr.bf16.mxu0 0
        %1510 = vmatpush1.bf16.msra.mxu0 0
        %1511 = vmatprep.subr.bf16.mxu0 0
        %1512 = vmatpush1.bf16.msra.mxu0 0
        %1513 = vmatprep.subr.bf16.mxu0 0
        %1514 = vmatpush1.bf16.msra.mxu0 0
        %1515 = vmatprep.subr.bf16.mxu0 0
        %1516 = vmatpush1.bf16.msra.mxu0 0
        %1517 = vmatprep.subr.bf16.mxu0 0
        %1518 = vmatpush1.bf16.msra.mxu0 0
        %1519 = vmatprep.subr.bf16.mxu0 0
        %1520 = vmatpush1.bf16.msra.mxu0 0
        %1521 = vmatprep.subr.bf16.mxu0 0
        %1522 = vmatpush1.bf16.msra.mxu0 0
        %1523 = vmatprep.subr.bf16.mxu0 0
        %1524 = vmatpush1.bf16.msra.mxu0 0
        %1525 = vmatprep.mubr.bf16.mxu0 0
        %1526 = vmatmul.mubr.bf16.gmra.mrb[0].mxu0 %v1488
        %v1527 = vpop.f32.mrb[0].mxu0
        %v1528 = vadd.f32 0.0, %v1527
        %v1529 = vpop.f32.mrb[0].mxu0
        %v1530 = vpop.f32.mrb[0].mxu0
        %v1531 = vpop.f32.mrb[0].mxu0
        %1532 = vdwg.mxu0
        %1534 = vrot.lane.b32.xlu0 %v1232, 8
        %v1535 = vpop.permute.xlu0 %1534
        %1538 = vrot.lane.b32.xlu0 %v1380, 16
        %v1539 = vpop.permute.xlu0 %1538
        %1542 = vrot.lane.b32.xlu0 %v1528, 24
        %v1543 = vpop.permute.xlu0 %1542
        %v1545 = vsel %vm971, %v1084, %v1535
        %vm1546 = vcmask 130048
        %v1547 = vsel %vm1546, %v1545, %v1539
        %vm1548 = vcmask 195584
        %v1549 = vsel %vm1548, %v1547, %v1543
        %v1550 = vld [vmem:[%s789] sm:$0xff]
        %v1551 = vld [vmem:[%s789 + $0x8] sm:$0xff]
        %v1552 = vld [vmem:[%s789 + $0x10] sm:$0xff]
        %v1553 = vld [vmem:[%s789 + $0x18] sm:$0xff]
        %v1554 = vpack.c.bf16 %v1549, %v1549
        %v1555 = vpack.c.bf16 %v1551, %v1550
        %v1556 = vpack.c.bf16 %v1553, %v1552
        %v1557 = vld [vmem:[%s792] sm:$0x1]
        %v1559 = vlaneseq
        %v1560 = vshrl.u32 %v1559, 7
        %v1561 = vsub.s32 0, %v1560
        %v1562 = vrot.slane %v1557, %v1561
        %v1565 = vsel %vm889, %v1554, 0
        %1567 = vmatprep.subr.bf16.mxu0 0
        %1568 = vmatpush1.bf16.msra.mxu0 %v1555
        %1569 = vmatprep.subr.bf16.mxu0 0
        %1570 = vmatpush1.bf16.msra.mxu0 %v1556
        %1571 = vmatprep.subr.bf16.mxu0 0
        %1572 = vmatpush1.bf16.msra.mxu0 0
        %1573 = vmatprep.subr.bf16.mxu0 0
        %1574 = vmatpush1.bf16.msra.mxu0 0
        %1575 = vmatprep.subr.bf16.mxu0 0
        %1576 = vmatpush1.bf16.msra.mxu0 0
        %1577 = vmatprep.subr.bf16.mxu0 0
        %1578 = vmatpush1.bf16.msra.mxu0 0
        %1579 = vmatprep.subr.bf16.mxu0 0
        %1580 = vmatpush1.bf16.msra.mxu0 0
        %1581 = vmatprep.subr.bf16.mxu0 0
        %1582 = vmatpush1.bf16.msra.mxu0 0
        %1583 = vmatprep.subr.bf16.mxu0 0
        %1584 = vmatpush1.bf16.msra.mxu0 0
        %1585 = vmatprep.subr.bf16.mxu0 0
        %1586 = vmatpush1.bf16.msra.mxu0 0
        %1587 = vmatprep.subr.bf16.mxu0 0
        %1588 = vmatpush1.bf16.msra.mxu0 0
        %1589 = vmatprep.subr.bf16.mxu0 0
        %1590 = vmatpush1.bf16.msra.mxu0 0
        %1591 = vmatprep.subr.bf16.mxu0 0
        %1592 = vmatpush1.bf16.msra.mxu0 0
        %1593 = vmatprep.subr.bf16.mxu0 0
        %1594 = vmatpush1.bf16.msra.mxu0 0
        %1595 = vmatprep.subr.bf16.mxu0 0
        %1596 = vmatpush1.bf16.msra.mxu0 0
        %1597 = vmatprep.subr.bf16.mxu0 0
        %1598 = vmatpush1.bf16.msra.mxu0 0
        %1599 = vmatprep.mubr.bf16.mxu0 0
        %1600 = vmatmul.mubr.bf16.gmra.mrb[0].mxu0 %v1565
        %v1601 = vpop.f32.mrb[0].mxu0
        %v1602 = vadd.f32 %v1562, %v1601
        %v1603 = vpop.f32.mrb[0].mxu0
        %v1604 = vpop.f32.mrb[0].mxu0
        %v1605 = vpop.f32.mrb[0].mxu0
        %1606 = vdwg.mxu0
        %v1607 = vadd.f32 %v1602, %v873
        %v1608 = vld [vmem:[%s795] sm:$0x1]
        %v1609 = vld [vmem:[%s798] sm:$0x1]
        %v1610 = vsel %vm889, %v1607, 0.0
        %1611 = vadd.xlane.f32.xlu0 %v1610
        %v1612 = vpop.xlane.xlu0 %1611
        %v1613 = vrcp.pop 32.0
        %v1614 = vmul.f32 %v1612, %v1613
        %v1615 = vsub.f32 %v1607, %v1614
        %v1616 = vmul.f32 %v1615, %v1615
        %v1617 = vsel %vm889, %v1616, 0.0
        %1618 = vadd.xlane.f32.xlu0 %v1617
        %v1619 = vpop.xlane.xlu0 %1618
        %v1620 = vmul.f32 %v1619, %v1613
        %v1621 = vadd.f32 %v1620, 1e-12
        %v1622 = vrsqrt.pop %v1621
        %v1623 = vmul.f32 %v1615, %v1622
        %v1625 = vlaneseq
        %v1626 = vshrl.u32 %v1625, 7
        %v1627 = vsub.s32 0, %v1626
        %v1628 = vrot.slane %v1608, %v1627
        %v1630 = vmul.f32 %v1623, %v1628
        %v1632 = vlaneseq
        %v1633 = vshrl.u32 %v1632, 7
        %v1634 = vsub.s32 0, %v1633
        %v1635 = vrot.slane %v1609, %v1634
        %v1637 = vadd.f32 %v1630, %v1635
        %v1638 = vld [vmem:[%s803] sm:$0xff]
        %v1639 = vld [vmem:[%s803 + $0x8] sm:$0xff]
        %v1640 = vld [vmem:[%s803 + $0x10] sm:$0xff]
        %v1641 = vld [vmem:[%s803 + $0x18] sm:$0xff]
        %v1642 = vpack.c.bf16 %v1637, %v1637
        %v1643 = vpack.c.bf16 %v1639, %v1638
        %v1644 = vpack.c.bf16 %v1641, %v1640
        %v1645 = vld [vmem:[%s663] sm:$0x1]
        %v1647 = vlaneseq
        %v1648 = vshrl.u32 %v1647, 7
        %v1649 = vsub.s32 0, %v1648
        %v1650 = vrot.slane %v1645, %v1649
        %v1653 = vsel %vm889, %v1642, 0
        %1655 = vmatprep.subr.bf16.mxu0 0
        %1656 = vmatpush1.bf16.msra.mxu0 %v1643
        %1657 = vmatprep.subr.bf16.mxu0 0
        %1658 = vmatpush1.bf16.msra.mxu0 %v1644
        %1659 = vmatprep.subr.bf16.mxu0 0
        %1660 = vmatpush1.bf16.msra.mxu0 0
        %1661 = vmatprep.subr.bf16.mxu0 0
        %1662 = vmatpush1.bf16.msra.mxu0 0
        %1663 = vmatprep.subr.bf16.mxu0 0
        %1664 = vmatpush1.bf16.msra.mxu0 0
        %1665 = vmatprep.subr.bf16.mxu0 0
        %1666 = vmatpush1.bf16.msra.mxu0 0
        %1667 = vmatprep.subr.bf16.mxu0 0
        %1668 = vmatpush1.bf16.msra.mxu0 0
        %1669 = vmatprep.subr.bf16.mxu0 0
        %1670 = vmatpush1.bf16.msra.mxu0 0
        %1671 = vmatprep.subr.bf16.mxu0 0
        %1672 = vmatpush1.bf16.msra.mxu0 0
        %1673 = vmatprep.subr.bf16.mxu0 0
        %1674 = vmatpush1.bf16.msra.mxu0 0
        %1675 = vmatprep.subr.bf16.mxu0 0
        %1676 = vmatpush1.bf16.msra.mxu0 0
        %1677 = vmatprep.subr.bf16.mxu0 0
        %1678 = vmatpush1.bf16.msra.mxu0 0
        %1679 = vmatprep.subr.bf16.mxu0 0
        %1680 = vmatpush1.bf16.msra.mxu0 0
        %1681 = vmatprep.subr.bf16.mxu0 0
        %1682 = vmatpush1.bf16.msra.mxu0 0
        %1683 = vmatprep.subr.bf16.mxu0 0
        %1684 = vmatpush1.bf16.msra.mxu0 0
        %1685 = vmatprep.subr.bf16.mxu0 0
        %1686 = vmatpush1.bf16.msra.mxu0 0
        %1687 = vmatprep.mubr.bf16.mxu0 0
        %1688 = vmatmul.mubr.bf16.gmra.mrb[0].mxu0 %v1653
        %v1689 = vpop.f32.mrb[0].mxu0
        %v1690 = vadd.f32 %v1650, %v1689
        %v1691 = vpop.f32.mrb[0].mxu0
        %v1692 = vpop.f32.mrb[0].mxu0
        %v1693 = vpop.f32.mrb[0].mxu0
        %1694 = vdwg.mxu0
        %v1695 = vmul.f32 %v1690, 0.5
        %v1696 = vmul.f32 %v1690, 0.70710677
        %v1697 = verf.f32.pop %v1696
        %v1698 = vadd.f32 %v1697, 1.0
        %v1699 = vmul.f32 %v1695, %v1698
        %v1700 = vld [vmem:[%s808] sm:$0xff]
        %v1701 = vld [vmem:[%s808 + $0x8] sm:$0xff]
        %v1702 = vld [vmem:[%s808 + $0x10] sm:$0xff]
        %v1703 = vld [vmem:[%s808 + $0x18] sm:$0xff]
        %v1704 = vld [vmem:[%s808 + $0x20] sm:$0xff]
        %v1705 = vld [vmem:[%s808 + $0x28] sm:$0xff]
        %v1706 = vld [vmem:[%s808 + $0x30] sm:$0xff]
        %v1707 = vld [vmem:[%s808 + $0x38] sm:$0xff]
        %v1708 = vpack.c.bf16 %v1699, %v1699
        %v1709 = vpack.c.bf16 %v1701, %v1700
        %v1710 = vpack.c.bf16 %v1703, %v1702
        %v1711 = vpack.c.bf16 %v1705, %v1704
        %v1712 = vpack.c.bf16 %v1707, %v1706
        %v1713 = vld [vmem:[%s811] sm:$0x1]
        %v1715 = vlaneseq
        %v1716 = vshrl.u32 %v1715, 7
        %v1717 = vsub.s32 0, %v1716
        %v1718 = vrot.slane %v1713, %v1717
        %vm1720 = vcmask 523264
        %v1722 = vsel %vm1720, %v1708, 0
        %1724 = vmatprep.subr.bf16.mxu0 0
        %1725 = vmatpush1.bf16.msra.mxu0 %v1709
        %1726 = vmatprep.subr.bf16.mxu0 0
        %1727 = vmatpush1.bf16.msra.mxu0 %v1710
        %1728 = vmatprep.subr.bf16.mxu0 0
        %1729 = vmatpush1.bf16.msra.mxu0 %v1711
        %1730 = vmatprep.subr.bf16.mxu0 0
        %1731 = vmatpush1.bf16.msra.mxu0 %v1712
        %1732 = vmatprep.subr.bf16.mxu0 0
        %1733 = vmatpush1.bf16.msra.mxu0 0
        %1734 = vmatprep.subr.bf16.mxu0 0
        %1735 = vmatpush1.bf16.msra.mxu0 0
        %1736 = vmatprep.subr.bf16.mxu0 0
        %1737 = vmatpush1.bf16.msra.mxu0 0
        %1738 = vmatprep.subr.bf16.mxu0 0
        %1739 = vmatpush1.bf16.msra.mxu0 0
        %1740 = vmatprep.subr.bf16.mxu0 0
        %1741 = vmatpush1.bf16.msra.mxu0 0
        %1742 = vmatprep.subr.bf16.mxu0 0
        %1743 = vmatpush1.bf16.msra.mxu0 0
        %1744 = vmatprep.subr.bf16.mxu0 0
        %1745 = vmatpush1.bf16.msra.mxu0 0
        %1746 = vmatprep.subr.bf16.mxu0 0
        %1747 = vmatpush1.bf16.msra.mxu0 0
        %1748 = vmatprep.subr.bf16.mxu0 0
        %1749 = vmatpush1.bf16.msra.mxu0 0
        %1750 = vmatprep.subr.bf16.mxu0 0
        %1751 = vmatpush1.bf16.msra.mxu0 0
        %1752 = vmatprep.subr.bf16.mxu0 0
        %1753 = vmatpush1.bf16.msra.mxu0 0
        %1754 = vmatprep.subr.bf16.mxu0 0
        %1755 = vmatpush1.bf16.msra.mxu0 0
        %1756 = vmatprep.mubr.bf16.mxu0 0
        %1757 = vmatmul.mubr.bf16.gmra.mrb[0].mxu0 %v1722
        %v1758 = vpop.f32.mrb[0].mxu0
        %v1759 = vadd.f32 %v1718, %v1758
        %v1760 = vpop.f32.mrb[0].mxu0
        %v1761 = vpop.f32.mrb[0].mxu0
        %v1762 = vpop.f32.mrb[0].mxu0
        %1763 = vdwg.mxu0
        %v1764 = vadd.f32 %v1759, %v1637
        %v1765 = vld [vmem:[%s814] sm:$0x1]
        %v1766 = vld [vmem:[%s817] sm:$0x1]
        %v1767 = vsel %vm889, %v1764, 0.0
        %1768 = vadd.xlane.f32.xlu0 %v1767
        %v1769 = vpop.xlane.xlu0 %1768
        %v1770 = vmul.f32 %v1769, %v1613
        %v1771 = vsub.f32 %v1764, %v1770
        %v1772 = vmul.f32 %v1771, %v1771
        %v1773 = vsel %vm889, %v1772, 0.0
        %1774 = vadd.xlane.f32.xlu0 %v1773
        %v1775 = vpop.xlane.xlu0 %1774
        %v1776 = vmul.f32 %v1775, %v1613
        %v1777 = vadd.f32 %v1776, 1e-12
        %v1778 = vrsqrt.pop %v1777
        %v1779 = vmul.f32 %v1771, %v1778
        %v1781 = vlaneseq
        %v1782 = vshrl.u32 %v1781, 7
        %v1783 = vsub.s32 0, %v1782
        %v1784 = vrot.slane %v1765, %v1783
        %v1786 = vmul.f32 %v1779, %v1784
        %v1788 = vlaneseq
        %v1789 = vshrl.u32 %v1788, 7
        %v1790 = vsub.s32 0, %v1789
        %v1791 = vrot.slane %v1766, %v1790
        %v1793 = vadd.f32 %v1786, %v1791
        %1794 = vst.msk [vmem:[#allocation2] sm:$0xff] %vm889, %v1793
        %1795 = vst.msk [vmem:[%s834] sm:$0xff] %vm889, %v1793
        %p1796 = scmp.lt.s32.totalorder %s40, 1
        %s1797 = scalar_select %p1796, %s40, 1
        %p1798 = scmp.lt.s32.totalorder %s39, 1
        %s1799 = scalar_select %p1798, %s39, 1
        %s1800 = smul.addr %s1799, 4
        %s1801 = smul.addr %s1797, 8
        %s1802 = sadd.s32 %s1800, %s1801
        %s1803 = smul.addr %s1802, 8
        %s1804 = scalar_lea.vmem %s16, %s1803
        %p1805 = scmp.lt.s32.totalorder %s40, 1
        %s1806 = scalar_select %p1805, %s40, 1
        %p1807 = scmp.lt.s32.totalorder %s39, 1
        %s1808 = scalar_select %p1807, %s39, 1
        %s1809 = smul.addr %s1806, 2
        %s1810 = sadd.s32 %s1808, %s1809
        %s1811 = smul.addr %s1810, 8
        %s1812 = scalar_lea.vmem %s17, %s1811
        // Predicated region
        $region97: #{encoder_forward.1} parent=83 // pred_check
          %p1813 = pneg %p473
        $region98: #{encoder_forward.1} parent=83 // pred_check_branch
          %1815 = sbr.rel (%p1813) target = $region100
        $region99: #{encoder_forward.1} parent=83 // pred_region
          _
        $region100: #{encoder_forward.1} parent=83 // pred_fallthru
          _
        // Predicated region
        $region101: #{encoder_forward.1} parent=83 // pred_check
          %p1816 = pneg %p501
        $region102: #{encoder_forward.1} parent=83 // pred_check_branch
          %1818 = sbr.rel (%p1816) target = $region104
        $region103: #{encoder_forward.1} parent=83 // pred_region
          _
        $region104: #{encoder_forward.1} parent=83 // pred_fallthru
          _
      $region84: #{encoder_forward.1} parent=5 // pred_fallthru
        _
      %p1819 = scmp.le.s32.totalorder 2, %s30
      // Predicated region
      $region105: #{encoder_forward.1} parent=5 // pred_check
        %p1820 = pneg %p1819
      $region106: #{encoder_forward.1} parent=5 // pred_check_branch
        %1822 = sbr.rel (%p1820) target = $region108
      $region107: #{encoder_forward.1} parent=5 // pred_region
        %s1823 = ssub.s32 %s30, 2
        // Predicated region
        $region109: #{encoder_forward.1} parent=107 // pred_check
          %p1824 = pneg %p479
        $region110: #{encoder_forward.1} parent=107 // pred_check_branch
          %1826 = sbr.rel (%p1824) target = $region112
        $region111: #{encoder_forward.1} parent=107 // pred_region
          %p1827 = scmp.lt.s32.totalorder %s42, 1
          %s1828 = scalar_select %p1827, %s42, 1
          %p1829 = scmp.lt.s32.totalorder %s41, 1
          %s1830 = scalar_select %p1829, %s41, 1
          %s1831 = smul.addr %s1830, 4
          %s1832 = smul.addr %s1828, 8
          %s1833 = sadd.s32 %s1831, %s1832
          %s1834 = smul.addr %s1833, 8
          %s1835 = scalar_lea.vmem %s16, %s1834
        $region112: #{encoder_forward.1} parent=107 // pred_fallthru
          _
        // Predicated region
        $region113: #{encoder_forward.1} parent=107 // pred_check
          %p1836 = pneg %p507
        $region114: #{encoder_forward.1} parent=107 // pred_check_branch
          %1838 = sbr.rel (%p1836) target = $region116
        $region115: #{encoder_forward.1} parent=107 // pred_region
          %p1839 = scmp.lt.s32.totalorder %s42, 1
          %s1840 = scalar_select %p1839, %s42, 1
          %p1841 = scmp.lt.s32.totalorder %s41, 1
          %s1842 = scalar_select %p1841, %s41, 1
          %s1843 = smul.addr %s1840, 2
          %s1844 = sadd.s32 %s1842, %s1843
          %s1845 = smul.addr %s1844, 8
          %s1846 = scalar_lea.vmem %s17, %s1845
        $region116: #{encoder_forward.1} parent=107 // pred_fallthru
          _
      $region108: #{encoder_forward.1} parent=5 // pred_fallthru
        _
    $region6: #{encoder_forward.1} parent=1 // loop_footer
      %s34 = sadd.s32 1, %s30
    $region7: #{encoder_forward.1} parent=1 // loop_footer_branch
      %29 = sbr.rel target = $region3
    $region8: #{encoder_forward.1} parent=1 // loop_exit
      _
    %1847 = vsyncpa [#allocation4], 1
    %s1848 = scalar_lea.sflag [#allocation4], 1
    %1849 = vsyncpa %s1848, 1
    %1850 = vsyncpa [#allocation6], 1
    %s1851 = scalar_lea.sflag [#allocation6], 1
    %1852 = vsyncpa %s1851, 1

</llo_original>
